<compile_context>
chip_gen: v6e
topology: v6e:2x2x1
jax: 0.10.0
libtpu: 0.0.40
codegen_flags: <defaults>
</compile_context>

<pallas_src>
import numpy as np
import jax
import jax.numpy as jnp
from jax import lax
from jax.experimental import pallas as pl
from jax.experimental.pallas import tpu as pltpu


def _round_up(v, m):
    return ((v + m - 1) // m) * m


# ----------------------------------------------------------------------------
# Pallas kernel: one upper-triangular (i, j) tile of
#   dist = sqrt(max(||xi||^2 + ||xj||^2 - 2<xi,xj>, 1e-12))
# The Gram contribution is accumulated directly into out_ref (f32) over the
# (optional) K grid axis; the epilogue rewrites the tile in place at the last
# K step.
# ----------------------------------------------------------------------------
def _pairwise_dist_kernel(i_idx_ref, j_idx_ref,           # scalar prefetch (schedule)
                          sq_row_ref, sq_col_ref, xi_ref, xj_ref, out_ref):
    del i_idx_ref, j_idx_ref
    k = pl.program_id(1)

    @pl.when(k == 0)
    def _():
        out_ref[...] = jnp.zeros_like(out_ref)

    # Gram block on the MXU: contract the feature (last) axes of both row
    # blocks directly — no transpose on the critical path.  HIGHEST precision
    # keeps the f32 expansion consistent with the f32 torch reference.
    out_ref[...] += lax.dot_general(
        xi_ref[...], xj_ref[...],
        dimension_numbers=(((1,), (1,)), ((), ())),
        preferred_element_type=jnp.float32,
        precision=lax.Precision.HIGHEST,
    )

    @pl.when(k == pl.num_programs(1) - 1)
    def _():
        # Epilogue: one VPU broadcast-add, one VPU max, one EUP sqrt per vreg.
        d2 = sq_row_ref[...] + sq_col_ref[...] - 2.0 * out_ref[...]
        out_ref[...] = jnp.sqrt(jnp.maximum(d2, 1e-12))


def _pairwise_dist_impl(x, tile, max_full_d):
    x = jnp.asarray(x, dtype=jnp.float32)
    n, d = x.shape

    # Output tile: lane/MXU aligned (128-multiple), clamped so tiny inputs
    # don't over-pad.  256+ fills the v6e/v7x 256-wide MXU.
    tile = max(128, min(int(tile), _round_up(max(n, 1), 128)))
    n_pad = _round_up(max(n, 1), tile)

    if d <= max_full_d:
        tk, d_pad = d, d              # full-D panel: no D padding, one K step
    else:
        tk = 512                      # wide features: K-tile and accumulate
        d_pad = _round_up(d, tk)
    nk = d_pad // tk

    nt = n_pad // tile
    # Upper-triangular (i <= j) tile schedule fed to index_maps via scalar
    # prefetch.  j varies fastest, so the xi panel stays VMEM-resident across
    # consecutive grid steps when nk == 1.
    tri_i, tri_j = np.triu_indices(nt)
    i_idx = jnp.asarray(tri_i, dtype=jnp.int32)
    j_idx = jnp.asarray(tri_j, dtype=jnp.int32)
    num_tiles = int(tri_i.shape[0])

    x_p = x
    if n_pad != n or d_pad != d:
        # Zero padding is exact: padded features/rows contribute 0 everywhere.
        x_p = jnp.pad(x, ((0, n_pad - n), (0, d_pad - d)))

    # Squared norms hoisted out of the kernel (computed once by XLA).
    sq = jnp.sum(x_p * x_p, axis=1, keepdims=True)           # (n_pad, 1)
    sq_col = sq.reshape(1, n_pad)                             # (1, n_pad)

    out = pl.pallas_call(
        _pairwise_dist_kernel,
        out_shape=jax.ShapeDtypeStruct((n_pad, n_pad), jnp.float32),
        grid_spec=pltpu.PrefetchScalarGridSpec(
            num_scalar_prefetch=2,
            grid=(num_tiles, nk),
            in_specs=[
                pl.BlockSpec((tile, 1), lambda t, k, ir, jr: (ir[t], 0)),   # ||xi||^2
                pl.BlockSpec((1, tile), lambda t, k, ir, jr: (0, jr[t])),   # ||xj||^2
                pl.BlockSpec((tile, tk), lambda t, k, ir, jr: (ir[t], k)),  # row panel
                pl.BlockSpec((tile, tk), lambda t, k, ir, jr: (jr[t], k)),  # col panel
            ],
            out_specs=pl.BlockSpec((tile, tile),
                                   lambda t, k, ir, jr: (ir[t], jr[t])),
        ),
        compiler_params=pltpu.CompilerParams(
            dimension_semantics=("arbitrary", "arbitrary"),
            vmem_limit_bytes=64 << 20,
        ),
    )(i_idx, j_idx, sq, sq_col, x_p, x_p)

    # Only upper-triangular tiles were computed (lower tiles are unwritten);
    # mirror the upper half onto the lower half.  Diagonal tiles are computed
    # in full inside the kernel, so an element-wise select is exact.
    out = out[:n, :n]
    r = jnp.arange(n)[:, None]
    c = jnp.arange(n)[None, :]
    return jnp.where(r <= c, out, out.T)


_pairwise_dist_jit = jax.jit(_pairwise_dist_impl, static_argnums=(1, 2))


def pairwise_dist(x, *, tile=256, max_full_d=2048):
    """Pairwise Euclidean distance matrix (N, N) of the rows of x (N, D)."""
    return _pairwise_dist_jit(x, int(tile), int(max_full_d))


# ----------------------------------------------------------------------------
# weighty_new (host-side, operates on 1-element numpy arrays, same as torch)
# ----------------------------------------------------------------------------
def weighty_new(d1, d2, pair_type, op_type):
    if op_type == 'mean':
        return (d1 + d2) / 2.0
    elif op_type == 'max':
        return np.maximum(d1, d2)
    elif op_type == 'min':
        return np.minimum(d1, d2)
    elif op_type == 'max-min':
        if pair_type == 1:
            return np.maximum(d1, d2)
        elif pair_type == 0:
            return np.minimum(d1, d2)
    elif op_type == 'weighty':
        if pair_type == 1:
            exp_sum = np.exp(d1) + np.exp(d2)
            d_sum = (np.exp(d1) * d1 + np.exp(d2) * d2) / exp_sum
        elif pair_type == 0:
            exp_sum = np.exp(-d1) + np.exp(-d2) + 1e-06
            d_sum = (np.exp(-d1) * d1 + np.exp(-d2) * d2) / exp_sum
        return d_sum


# ----------------------------------------------------------------------------
# RobustTripletLoss_LCNL forward (distance matrix on TPU via Pallas; mining on host)
# ----------------------------------------------------------------------------
class RobustTripletLossLCNL:
    def __init__(self, batch_size, margin, op_type):
        self.batch_size = batch_size
        self.margin = margin
        self.op_type = op_type

    def forward(self, inputs, prediction, targets, true_targets, prob, threshold):
        n = inputs.shape[0]

        # Hot path: pairwise distance matrix computed by the Pallas kernel.
        dist = np.asarray(jax.device_get(jax.block_until_ready(pairwise_dist(inputs))))

        prediction = np.asarray(prediction)
        targets = np.asarray(targets)
        prob = np.asarray(prob)

        is_pos = targets[None, :] == targets[:, None]   # is_pos[i][j] = (t[j] == t[i])
        is_neg = ~is_pos
        is_confident = prob >= threshold

        # TODO(synk): the per-row hard-example mining below (argsort + data-dependent
        # while-loops over confidence) has no clean Pallas equivalent; kept on host.
        # A device-side masked top-k pre-selection would shrink the D2H transfer to
        # O(N*k) but is left out to preserve exact tie-breaking semantics.
        dist_ap, dist_an = [], []
        cnt, loss = 0, 0.0
        loss_inverse = False
        for i in range(n):
            if is_confident[i]:
                pos_idx = np.nonzero(is_pos[i])[0]
                neg_idx = np.nonzero(is_neg[i])[0]
                rank_pos_index = np.argsort(dist[i][pos_idx])
                hard_pos_index = pos_idx[rank_pos_index[-1]]
                rank_neg_index = np.argsort(dist[i][neg_idx])
                hard_neg_index = neg_idx[rank_neg_index[0]]
                dist_ap.append(dist[i][hard_pos_index][None])
                dist_an.append(dist[i][hard_neg_index][None])
                if prob[hard_pos_index] >= threshold and prob[hard_neg_index] >= threshold:
                    pass
                elif prob[hard_pos_index] >= threshold and prob[hard_neg_index] < threshold:
                    is_FN = np.argmax(prediction[hard_neg_index]) == targets[i]
                    if is_FN:
                        tmp = rank_neg_index[1]
                        hard_neg_index_new = neg_idx[tmp]
                        j = 1
                        loop_cnt = 0
                        while prob[hard_neg_index_new] < threshold:
                            j += 1
                            tmp = rank_neg_index[j]
                            hard_neg_index_new = neg_idx[tmp]
                            loop_cnt += 1
                            if loop_cnt >= 10:
                                break
                        dist_ap[cnt] = weighty_new(dist[i][hard_pos_index][None],
                                                   dist[i][hard_neg_index][None],
                                                   pair_type=1, op_type=self.op_type)
                        dist_an[cnt] = dist[i][hard_neg_index_new][None]
                    else:
                        pass
                elif prob[hard_pos_index] < threshold and prob[hard_neg_index] >= threshold:
                    tmp = rank_pos_index[-2]
                    hard_pos_index_new = pos_idx[tmp]
                    j = 2
                    loop_cnt = 0
                    while prob[hard_pos_index_new] < threshold:
                        j += 1
                        tmp = rank_pos_index[-j]
                        hard_pos_index_new = pos_idx[tmp]
                        loop_cnt += 1
                        if loop_cnt >= 5:
                            break
                    dist_an[cnt] = weighty_new(dist[i][hard_pos_index][None],
                                               dist[i][hard_neg_index][None],
                                               pair_type=0, op_type=self.op_type)
                    dist_ap[cnt] = dist[i][hard_pos_index_new][None]
                elif prob[hard_pos_index] < threshold and prob[hard_neg_index] < threshold:
                    is_FN = np.argmax(prediction[hard_neg_index]) == targets[i]
                    if is_FN:
                        loss_inverse = True
                    else:
                        tmp = rank_pos_index[-2]
                        hard_pos_index_new = pos_idx[tmp]
                        j = 2
                        loop_cnt = 0
                        while prob[hard_pos_index_new] < threshold:
                            j += 1
                            tmp = rank_pos_index[-j]
                            hard_pos_index_new = pos_idx[tmp]
                            loop_cnt += 1
                            if loop_cnt >= 5:
                                break
                        dist_an[cnt] = weighty_new(dist[i][hard_pos_index][None],
                                                   dist[i][hard_neg_index][None],
                                                   pair_type=0, op_type=self.op_type)
                        dist_ap[cnt] = dist[i][hard_pos_index_new][None]
                if loss_inverse:
                    loss = loss + np.clip(dist_an[cnt] - dist_ap[cnt] + self.margin, 0.0, None)
                else:
                    loss = loss + np.clip(dist_ap[cnt] - dist_an[cnt] + self.margin, 0.0, None)
                cnt += 1
                loss_inverse = False
            else:
                continue
        if cnt == 0:
            return (np.array([0.0], dtype=np.float32), 0, cnt)
        else:
            dist_ap = np.concatenate(dist_ap)
            dist_an = np.concatenate(dist_an)
            correct = int((dist_an >= dist_ap).sum())
            return (loss / cnt, correct, cnt)


# ----------------------------------------------------------------------------
# main
# ----------------------------------------------------------------------------
if __name__ == "__main__":
    key = jax.random.PRNGKey(0)
    n, d, num_classes = 8, 32, 4

    k1, k2, k3 = jax.random.split(key, 3)
    inputs = jax.random.normal(k1, (n, d), dtype=jnp.float32)
    prediction = jax.random.normal(k2, (n, num_classes), dtype=jnp.float32)
    targets = jnp.array([0, 0, 1, 1, 2, 2, 3, 3], dtype=jnp.int32)
    true_targets = targets
    prob = 0.5 + 0.5 * jax.random.uniform(k3, (n,), dtype=jnp.float32)  # all confident
    threshold = 0.4
    margin = 0.3

    # Run the Pallas kernel once and block on the result.
    dist_mat = pairwise_dist(inputs)
    jax.block_until_ready(dist_mat)

    # Correctness check against the reference formula on host.  The diagonal
    # is excluded: the ||x||^2 expansion leaves a summation-order-dependent
    # residual there that sqrt amplifies (same behaviour as the torch
    # reference's addmm path); it never affects the mining semantics.
    x_np = np.asarray(inputs, dtype=np.float32)
    sq_np = np.sum(x_np * x_np, axis=1, keepdims=True)
    d2_np = sq_np + sq_np.T - 2.0 * (x_np @ x_np.T)
    dist_ref = np.sqrt(np.clip(d2_np, 1e-12, None))
    dist_ker = np.asarray(dist_mat)
    offdiag = ~np.eye(n, dtype=bool)
    assert np.allclose(dist_ker[offdiag], dist_ref[offdiag], rtol=1e-3, atol=1e-3)

    loss_mod = RobustTripletLossLCNL(batch_size=n, margin=margin, op_type='weighty')
    loss, correct, cnt = loss_mod.forward(inputs, prediction, targets,
                                          true_targets, prob, threshold)
    assert np.isfinite(np.asarray(loss)).all()
    assert cnt == n
    print("KERNEL_OK")
</pallas_src>

<mosaic_0001>
module attributes {stable_mosaic.version = 11 : i64} {
  func.func @_pairwise_dist_kernel(%arg0: i32, %arg1: i32, %arg2: memref<1xi32, #tpu.memory_space<smem>>, %arg3: memref<1xi32, #tpu.memory_space<smem>>, %arg4: memref<128x1xf32, #tpu.memory_space<vmem>>, %arg5: memref<1x128xf32, #tpu.memory_space<vmem>>, %arg6: memref<128x32xf32, #tpu.memory_space<vmem>>, %arg7: memref<128x32xf32, #tpu.memory_space<vmem>>, %arg8: memref<128x128xf32, #tpu.memory_space<vmem>>) attributes {dimension_semantics = [#tpu.dimension_semantics<arbitrary>, #tpu.dimension_semantics<arbitrary>], iteration_bounds = array<i64: 1, 1>, scalar_prefetch = 2 : i64, scratch_operands = 0 : i64, tpu.core_type = #tpu.core_type<tc>, window_params = [{transform_indices = @transform_0, window_bounds = array<i64: 128, 1>}, {transform_indices = @transform_1, window_bounds = array<i64: 1, 128>}, {transform_indices = @transform_2, window_bounds = array<i64: 128, 32>}, {transform_indices = @transform_3, window_bounds = array<i64: 128, 32>}, {transform_indices = @transform_4, window_bounds = array<i64: 128, 128>}]} {
    %c0_i32 = arith.constant 0 : i32
    %0 = arith.cmpi eq, %arg1, %c0_i32 : i32
    %1 = arith.extui %0 : i1 to i32
    %c0_i32_0 = arith.constant 0 : i32
    %2 = arith.cmpi ne, %1, %c0_i32_0 : i32
    scf.if %2 {
      %cst_10 = arith.constant 0.000000e+00 : f32
      %12 = vector.broadcast %cst_10 : f32 to vector<128x128xf32>
      %c0_11 = arith.constant 0 : index
      %c0_12 = arith.constant 0 : index
      %13 = vector.load %arg8[%c0_11, %c0_12] : memref<128x128xf32, #tpu.memory_space<vmem>>, vector<128x128xf32>
      tpu.vector_store %arg8[%c0_11, %c0_12], %12 {strides = array<i32>} : memref<128x128xf32, #tpu.memory_space<vmem>>, vector<128x128xf32>,
    } else {
    }
    %c0 = arith.constant 0 : index
    %c0_1 = arith.constant 0 : index
    %3 = vector.load %arg8[%c0, %c0_1] : memref<128x128xf32, #tpu.memory_space<vmem>>, vector<128x128xf32>
    %c0_2 = arith.constant 0 : index
    %c0_3 = arith.constant 0 : index
    %4 = vector.load %arg6[%c0_2, %c0_3] : memref<128x32xf32, #tpu.memory_space<vmem>>, vector<128x32xf32>
    %c0_4 = arith.constant 0 : index
    %c0_5 = arith.constant 0 : index
    %5 = vector.load %arg7[%c0_4, %c0_5] : memref<128x32xf32, #tpu.memory_space<vmem>>, vector<128x32xf32>
    %cst = arith.constant dense<0.000000e+00> : vector<128x128xf32>
    %6 = tpu.matmul %4, %5, %cst {dimension_numbers = #tpu.dot_dimension_numbers<[1], [1], [0], [0], [0, 0, 1, 0], [], []>, precision = #tpu.contract_precision<fp32>} : vector<128x32xf32>, vector<128x32xf32>, vector<128x128xf32> -> vector<128x128xf32>
    %7 = arith.addf %3, %6 : vector<128x128xf32>
    %c0_6 = arith.constant 0 : index
    %c0_7 = arith.constant 0 : index
    %8 = vector.load %arg8[%c0_6, %c0_7] : memref<128x128xf32, #tpu.memory_space<vmem>>, vector<128x128xf32>
    tpu.vector_store %arg8[%c0_6, %c0_7], %7 {strides = array<i32>} : memref<128x128xf32, #tpu.memory_space<vmem>>, vector<128x128xf32>,
    %c0_i32_8 = arith.constant 0 : i32
    %9 = arith.cmpi eq, %arg1, %c0_i32_8 : i32
    %10 = arith.extui %9 : i1 to i32
    %c0_i32_9 = arith.constant 0 : i32
    %11 = arith.cmpi ne, %10, %c0_i32_9 : i32
    scf.if %11 {
      %c0_10 = arith.constant 0 : index
      %c0_11 = arith.constant 0 : index
      %12 = vector.load %arg4[%c0_10, %c0_11] : memref<128x1xf32, #tpu.memory_space<vmem>>, vector<128x1xf32>
      %c0_12 = arith.constant 0 : index
      %c0_13 = arith.constant 0 : index
      %13 = vector.load %arg5[%c0_12, %c0_13] : memref<1x128xf32, #tpu.memory_space<vmem>>, vector<1x128xf32>
      %14 = vector.broadcast %12 : vector<128x1xf32> to vector<128x128xf32>
      %15 = vector.broadcast %13 : vector<1x128xf32> to vector<128x128xf32>
      %16 = arith.addf %14, %15 : vector<128x128xf32>
      %c0_14 = arith.constant 0 : index
      %c0_15 = arith.constant 0 : index
      %17 = vector.load %arg8[%c0_14, %c0_15] : memref<128x128xf32, #tpu.memory_space<vmem>>, vector<128x128xf32>
      %cst_16 = arith.constant 2.000000e+00 : f32
      %18 = vector.broadcast %cst_16 : f32 to vector<128x128xf32>
      %19 = arith.mulf %18, %17 : vector<128x128xf32>
      %20 = arith.subf %16, %19 : vector<128x128xf32>
      %cst_17 = arith.constant 9.99999996E-13 : f32
      %21 = vector.broadcast %cst_17 : f32 to vector<128x128xf32>
      %22 = arith.maximumf %20, %21 : vector<128x128xf32>
      %23 = math.sqrt %22 : vector<128x128xf32>
      %c0_18 = arith.constant 0 : index
      %c0_19 = arith.constant 0 : index
      %24 = vector.load %arg8[%c0_18, %c0_19] : memref<128x128xf32, #tpu.memory_space<vmem>>, vector<128x128xf32>
      tpu.vector_store %arg8[%c0_18, %c0_19], %23 {strides = array<i32>} : memref<128x128xf32, #tpu.memory_space<vmem>>, vector<128x128xf32>,
    } else {
    }
    return
  }
  func.func @transform_0(%arg0: i32, %arg1: i32, %arg2: memref<1xi32, #tpu.memory_space<smem>>, %arg3: memref<1xi32, #tpu.memory_space<smem>>) -> (i32, i32) {
    %0 = arith.index_cast %arg0 : i32 to index
    %1 = memref.load %arg2[%0] : memref<1xi32, #tpu.memory_space<smem>>
    %c0_i32 = arith.constant 0 : i32
    %c0_i32_0 = arith.constant 0 : i32
    return %1, %c0_i32 : i32, i32
  }
  func.func @transform_1(%arg0: i32, %arg1: i32, %arg2: memref<1xi32, #tpu.memory_space<smem>>, %arg3: memref<1xi32, #tpu.memory_space<smem>>) -> (i32, i32) {
    %0 = arith.index_cast %arg0 : i32 to index
    %1 = memref.load %arg3[%0] : memref<1xi32, #tpu.memory_space<smem>>
    %c0_i32 = arith.constant 0 : i32
    %c0_i32_0 = arith.constant 0 : i32
    return %c0_i32, %1 : i32, i32
  }
  func.func @transform_2(%arg0: i32, %arg1: i32, %arg2: memref<1xi32, #tpu.memory_space<smem>>, %arg3: memref<1xi32, #tpu.memory_space<smem>>) -> (i32, i32) {
    %0 = arith.index_cast %arg0 : i32 to index
    %1 = memref.load %arg2[%0] : memref<1xi32, #tpu.memory_space<smem>>
    %c0_i32 = arith.constant 0 : i32
    return %1, %arg1 : i32, i32
  }
  func.func @transform_3(%arg0: i32, %arg1: i32, %arg2: memref<1xi32, #tpu.memory_space<smem>>, %arg3: memref<1xi32, #tpu.memory_space<smem>>) -> (i32, i32) {
    %0 = arith.index_cast %arg0 : i32 to index
    %1 = memref.load %arg3[%0] : memref<1xi32, #tpu.memory_space<smem>>
    %c0_i32 = arith.constant 0 : i32
    return %1, %arg1 : i32, i32
  }
  func.func @transform_4(%arg0: i32, %arg1: i32, %arg2: memref<1xi32, #tpu.memory_space<smem>>, %arg3: memref<1xi32, #tpu.memory_space<smem>>) -> (i32, i32) {
    %0 = arith.index_cast %arg0 : i32 to index
    %1 = memref.load %arg2[%0] : memref<1xi32, #tpu.memory_space<smem>>
    %2 = arith.index_cast %arg0 : i32 to index
    %3 = memref.load %arg3[%2] : memref<1xi32, #tpu.memory_space<smem>>
    %c0_i32 = arith.constant 0 : i32
    return %1, %3 : i32, i32
  }
}

</mosaic_0001>

<llo_original>
// kernel: _pairwise_dist_impl.1
$region0: #{_pairwise_dist_impl.1}
  #allocation0 [shape = 'u32[]', space=smem, size = 0x4, offset = 0x4, fixed_abs, tag = 'smem constant byte address 0x4 - core index']
  #allocation1 [shape = 'u32[144,128]{1,0:T(1,128)}', space=vmem, size = 0x12000, scoped, tag = 'internal scratch']
  #allocation2 [shape = 's32[1]{0}', space=sflag, size = 0x4, scoped, tag = 'scoped memory for _pairwise_dist_impl.1']
  #allocation3 [shape = 's32[1]{0:T(128)S(6)}', space=smem, size = 0x200, scoped, tag = 'prefetched SMEM operand 0']
  #allocation4 [shape = 's32[1]{0:T(128)S(6)}', space=smem, size = 0x200, scoped, tag = 'prefetched SMEM operand 1']
  %s0 = inlined_call_operand.<no memory space> [shape: s32[1], index: 0, kind: input, shape index: {}, may-alias: {0,1}]
  %s1 = inlined_call_operand.<no memory space> [shape: s32[1], index: 1, kind: input, shape index: {}, may-alias: {0,1}]
  %s2 = inlined_call_operand.vmem [shape: f32[128,1], index: 2, kind: input, shape index: {}]
  %s3 = inlined_call_operand.vmem [shape: f32[1,128], index: 3, kind: input, shape index: {}]
  %s4 = inlined_call_operand.vmem [shape: f32[128,32], index: 4, kind: input, shape index: {}, may-alias: {4,5}]
  %s5 = inlined_call_operand.vmem [shape: f32[128,32], index: 5, kind: input, shape index: {}, may-alias: {4,5}]
  %s6 = inlined_call_operand.vmem [shape: f32[128,128], index: 6, kind: output, shape index: {}]
  %s7 = sld [smem:[#allocation0]]
  $region34: #{_pairwise_dist_impl.1} parent=0
    _
  %s9 = ssub.s32 1, %s7
  %s10 = scalar_select 0, %s9, %s7
  %11 = sst [smem:[#allocation3]] %s0
  %12 = sst [smem:[#allocation4]] %s1
  // Predicated region
  $region2: #{_pairwise_dist_impl.1} parent=0 // pred_check
    _
  $region3: #{_pairwise_dist_impl.1} parent=0 // pred_check_branch
    %14 = sbr.rel (0) target = $region5
  $region4: #{_pairwise_dist_impl.1} parent=0 // pred_region
    %s15 = sld [smem:[#allocation3]]
    %s16 = smul.u32 16, %s15
    %p17 = scmp.lt.s32.totalorder %s16, 15
    %s18 = scalar_select %p17, %s16, 15
    %s19 = smul.addr %s18, 8
    %s20 = scalar_lea.vmem %s2, %s19
    %s21 = sld [smem:[#allocation3]]
    %s22 = smul.u32 16, %s21
  $region5: #{_pairwise_dist_impl.1} parent=0 // pred_fallthru
    _
  // Predicated region
  $region6: #{_pairwise_dist_impl.1} parent=0 // pred_check
    _
  $region7: #{_pairwise_dist_impl.1} parent=0 // pred_check_branch
    %24 = sbr.rel (0) target = $region9
  $region8: #{_pairwise_dist_impl.1} parent=0 // pred_region
    %s25 = sld [smem:[#allocation4]]
    %p26 = scmp.lt.s32.totalorder %s25, 0
    %s27 = scalar_select %p26, %s25, 0
    %s28 = scalar_lea.vmem %s3, %s27
    %s29 = sld [smem:[#allocation4]]
  $region9: #{_pairwise_dist_impl.1} parent=0 // pred_fallthru
    _
  // Predicated region
  $region10: #{_pairwise_dist_impl.1} parent=0 // pred_check
    _
  $region11: #{_pairwise_dist_impl.1} parent=0 // pred_check_branch
    %31 = sbr.rel (0) target = $region13
  $region12: #{_pairwise_dist_impl.1} parent=0 // pred_region
    %s32 = sld [smem:[#allocation3]]
    %s33 = smul.u32 16, %s32
    %p34 = scmp.lt.s32.totalorder %s33, 15
    %s35 = scalar_select %p34, %s33, 15
    %s36 = smul.addr %s35, 8
    %s37 = scalar_lea.vmem %s4, %s36
    %s38 = sld [smem:[#allocation3]]
    %s39 = smul.u32 16, %s38
  $region13: #{_pairwise_dist_impl.1} parent=0 // pred_fallthru
    _
  // Predicated region
  $region14: #{_pairwise_dist_impl.1} parent=0 // pred_check
    _
  $region15: #{_pairwise_dist_impl.1} parent=0 // pred_check_branch
    %41 = sbr.rel (0) target = $region17
  $region16: #{_pairwise_dist_impl.1} parent=0 // pred_region
    %s42 = sld [smem:[#allocation4]]
    %s43 = smul.u32 16, %s42
    %p44 = scmp.lt.s32.totalorder %s43, 15
    %s45 = scalar_select %p44, %s43, 15
    %s46 = smul.addr %s45, 8
    %s47 = scalar_lea.vmem %s5, %s46
    %s48 = sld [smem:[#allocation4]]
    %s49 = smul.u32 16, %s48
  $region17: #{_pairwise_dist_impl.1} parent=0 // pred_fallthru
    _
  %s50 = sld [smem:[#allocation3]]
  %s51 = smul.u32 16, %s50
  %p52 = scmp.lt.s32.totalorder %s51, 15
  %s53 = scalar_select %p52, %s51, 15
  %s54 = smul.addr %s53, 8
  %s55 = scalar_lea.vmem %s2, %s54
  %s56 = sld [smem:[#allocation4]]
  %p57 = scmp.lt.s32.totalorder %s56, 0
  %s58 = scalar_select %p57, %s56, 0
  %s59 = scalar_lea.vmem %s3, %s58
  %s60 = sld [smem:[#allocation3]]
  %s61 = smul.u32 16, %s60
  %p62 = scmp.lt.s32.totalorder %s61, 15
  %s63 = scalar_select %p62, %s61, 15
  %s64 = smul.addr %s63, 8
  %s65 = scalar_lea.vmem %s4, %s64
  %s66 = sld [smem:[#allocation4]]
  %s67 = smul.u32 16, %s66
  %p68 = scmp.lt.s32.totalorder %s67, 15
  %s69 = scalar_select %p68, %s67, 15
  %s70 = smul.addr %s69, 8
  %s71 = scalar_lea.vmem %s5, %s70
  %s72 = sld [smem:[#allocation3]]
  %s73 = sld [smem:[#allocation4]]
  %s74 = smul.u32 16, %s72
  %p75 = scmp.lt.s32.totalorder %s74, 15
  %s76 = scalar_select %p75, %s74, 15
  %p77 = scmp.lt.s32.totalorder %s73, 0
  %s78 = scalar_select %p77, %s73, 0
  %s79 = sadd.s32 %s78, %s76
  %s80 = smul.addr %s79, 8
  %s81 = scalar_lea.vmem %s6, %s80
  %s82 = sld [smem:[#allocation3]]
  %s83 = smul.u32 16, %s82
  %p84 = scmp.lt.s32.totalorder %s83, 15
  %s85 = scalar_select %p84, %s83, 15
  %s86 = smul.addr %s85, 8
  %s87 = scalar_lea.vmem %s2, %s86
  %s88 = sld [smem:[#allocation3]]
  %s89 = smul.u32 16, %s88
  %s90 = sld [smem:[#allocation4]]
  %p91 = scmp.lt.s32.totalorder %s90, 0
  %s92 = scalar_select %p91, %s90, 0
  %s93 = scalar_lea.vmem %s3, %s92
  %s94 = sld [smem:[#allocation4]]
  %s95 = sld [smem:[#allocation3]]
  %s96 = smul.u32 16, %s95
  %p97 = scmp.lt.s32.totalorder %s96, 15
  %s98 = scalar_select %p97, %s96, 15
  %s99 = smul.addr %s98, 8
  %s100 = scalar_lea.vmem %s4, %s99
  %s101 = sld [smem:[#allocation3]]
  %s102 = smul.u32 16, %s101
  %s103 = sld [smem:[#allocation4]]
  %s104 = smul.u32 16, %s103
  %p105 = scmp.lt.s32.totalorder %s104, 15
  %s106 = scalar_select %p105, %s104, 15
  %s107 = smul.addr %s106, 8
  %s108 = scalar_lea.vmem %s5, %s107
  %s109 = sld [smem:[#allocation4]]
  %s110 = smul.u32 16, %s109
  %s111 = sld [smem:[#allocation3]]
  %s112 = sld [smem:[#allocation4]]
  %s113 = smul.u32 16, %s111
  %p114 = scmp.lt.s32.totalorder %s113, 15
  %s115 = scalar_select %p114, %s113, 15
  %p116 = scmp.lt.s32.totalorder %s112, 0
  %s117 = scalar_select %p116, %s112, 0
  %s118 = sadd.s32 %s117, %s115
  %s119 = smul.addr %s118, 8
  %s120 = scalar_lea.vmem %s6, %s119
  %s121 = sld [smem:[#allocation3]]
  %s122 = sld [smem:[#allocation4]]
  %s123 = smul.u32 16, %s121
  %p124 = scmp.eq.s32.totalorder 0, 0
  // Predicated region
  $region18: #{_pairwise_dist_impl.1} parent=0 // pred_check
    %p125 = pneg %p124
  $region19: #{_pairwise_dist_impl.1} parent=0 // pred_check_branch
    %127 = sbr.rel (%p125) target = $region21
  $region20: #{_pairwise_dist_impl.1} parent=0 // pred_region
    %128 = vst [vmem:[%s120] sm:$0xff] 0.0
    %129 = vst [vmem:[%s120 + $0x8] sm:$0xff] 0.0
    %130 = vst [vmem:[%s120 + $0x10] sm:$0xff] 0.0
    %131 = vst [vmem:[%s120 + $0x18] sm:$0xff] 0.0
    %132 = vst [vmem:[%s120 + $0x20] sm:$0xff] 0.0
    %133 = vst [vmem:[%s120 + $0x28] sm:$0xff] 0.0
    %134 = vst [vmem:[%s120 + $0x30] sm:$0xff] 0.0
    %135 = vst [vmem:[%s120 + $0x38] sm:$0xff] 0.0
    %136 = vst [vmem:[%s120 + $0x40] sm:$0xff] 0.0
    %137 = vst [vmem:[%s120 + $0x48] sm:$0xff] 0.0
    %138 = vst [vmem:[%s120 + $0x50] sm:$0xff] 0.0
    %139 = vst [vmem:[%s120 + $0x58] sm:$0xff] 0.0
    %140 = vst [vmem:[%s120 + $0x60] sm:$0xff] 0.0
    %141 = vst [vmem:[%s120 + $0x68] sm:$0xff] 0.0
    %142 = vst [vmem:[%s120 + $0x70] sm:$0xff] 0.0
    %143 = vst [vmem:[%s120 + $0x78] sm:$0xff] 0.0
  $region21: #{_pairwise_dist_impl.1} parent=0 // pred_fallthru
    _
  %v144 = vld [vmem:[%s120] sm:$0xff]
  %v145 = vld [vmem:[%s120 + $0x8] sm:$0xff]
  %v146 = vld [vmem:[%s120 + $0x10] sm:$0xff]
  %v147 = vld [vmem:[%s120 + $0x18] sm:$0xff]
  %v148 = vld [vmem:[%s120 + $0x20] sm:$0xff]
  %v149 = vld [vmem:[%s120 + $0x28] sm:$0xff]
  %v150 = vld [vmem:[%s120 + $0x30] sm:$0xff]
  %v151 = vld [vmem:[%s120 + $0x38] sm:$0xff]
  %v152 = vld [vmem:[%s120 + $0x40] sm:$0xff]
  %v153 = vld [vmem:[%s120 + $0x48] sm:$0xff]
  %v154 = vld [vmem:[%s120 + $0x50] sm:$0xff]
  %v155 = vld [vmem:[%s120 + $0x58] sm:$0xff]
  %v156 = vld [vmem:[%s120 + $0x60] sm:$0xff]
  %v157 = vld [vmem:[%s120 + $0x68] sm:$0xff]
  %v158 = vld [vmem:[%s120 + $0x70] sm:$0xff]
  %v159 = vld [vmem:[%s120 + $0x78] sm:$0xff]
  %v160 = vld [vmem:[%s100] sm:$0xff]
  %v161 = vld [vmem:[%s100 + $0x8] sm:$0xff]
  %v162 = vld [vmem:[%s100 + $0x10] sm:$0xff]
  %v163 = vld [vmem:[%s100 + $0x18] sm:$0xff]
  %v164 = vld [vmem:[%s100 + $0x20] sm:$0xff]
  %v165 = vld [vmem:[%s100 + $0x28] sm:$0xff]
  %v166 = vld [vmem:[%s100 + $0x30] sm:$0xff]
  %v167 = vld [vmem:[%s100 + $0x38] sm:$0xff]
  %v168 = vld [vmem:[%s100 + $0x40] sm:$0xff]
  %v169 = vld [vmem:[%s100 + $0x48] sm:$0xff]
  %v170 = vld [vmem:[%s100 + $0x50] sm:$0xff]
  %v171 = vld [vmem:[%s100 + $0x58] sm:$0xff]
  %v172 = vld [vmem:[%s100 + $0x60] sm:$0xff]
  %v173 = vld [vmem:[%s100 + $0x68] sm:$0xff]
  %v174 = vld [vmem:[%s100 + $0x70] sm:$0xff]
  %v175 = vld [vmem:[%s100 + $0x78] sm:$0xff]
  %v176 = vld [vmem:[%s108] sm:$0xff]
  %v177 = vld [vmem:[%s108 + $0x8] sm:$0xff]
  %v178 = vld [vmem:[%s108 + $0x10] sm:$0xff]
  %v179 = vld [vmem:[%s108 + $0x18] sm:$0xff]
  %v180 = vld [vmem:[%s108 + $0x20] sm:$0xff]
  %v181 = vld [vmem:[%s108 + $0x28] sm:$0xff]
  %v182 = vld [vmem:[%s108 + $0x30] sm:$0xff]
  %v183 = vld [vmem:[%s108 + $0x38] sm:$0xff]
  %v184 = vld [vmem:[%s108 + $0x40] sm:$0xff]
  %v185 = vld [vmem:[%s108 + $0x48] sm:$0xff]
  %v186 = vld [vmem:[%s108 + $0x50] sm:$0xff]
  %v187 = vld [vmem:[%s108 + $0x58] sm:$0xff]
  %v188 = vld [vmem:[%s108 + $0x60] sm:$0xff]
  %v189 = vld [vmem:[%s108 + $0x68] sm:$0xff]
  %v190 = vld [vmem:[%s108 + $0x70] sm:$0xff]
  %v191 = vld [vmem:[%s108 + $0x78] sm:$0xff]
  %vm192 = vcmask 261120
  %v194 = vsel %vm192, %v160, 0
  %v197 = vsel %vm192, %v161, 0
  %v200 = vsel %vm192, %v162, 0
  %v203 = vsel %vm192, %v163, 0
  %v206 = vsel %vm192, %v164, 0
  %v209 = vsel %vm192, %v165, 0
  %v212 = vsel %vm192, %v166, 0
  %v215 = vsel %vm192, %v167, 0
  %v218 = vsel %vm192, %v168, 0
  %v221 = vsel %vm192, %v169, 0
  %v224 = vsel %vm192, %v170, 0
  %v227 = vsel %vm192, %v171, 0
  %v230 = vsel %vm192, %v172, 0
  %v233 = vsel %vm192, %v173, 0
  %v236 = vsel %vm192, %v174, 0
  %v239 = vsel %vm192, %v175, 0
  %v242 = vsel %vm192, %v176, 0
  %v245 = vsel %vm192, %v177, 0
  %v248 = vsel %vm192, %v178, 0
  %v251 = vsel %vm192, %v179, 0
  %v254 = vsel %vm192, %v180, 0
  %v257 = vsel %vm192, %v181, 0
  %v260 = vsel %vm192, %v182, 0
  %v263 = vsel %vm192, %v183, 0
  %v266 = vsel %vm192, %v184, 0
  %v269 = vsel %vm192, %v185, 0
  %v272 = vsel %vm192, %v186, 0
  %v275 = vsel %vm192, %v187, 0
  %v278 = vsel %vm192, %v188, 0
  %v281 = vsel %vm192, %v189, 0
  %v284 = vsel %vm192, %v190, 0
  %v287 = vsel %vm192, %v191, 0
  %289 = vmatprep.subr.mxu0 0.0
  %v290 = vand.u32 %v287, 4294901760
  %291 = vmatpush1.xpose.msra.mxu0 %v290
  %292 = vmatprep.subr.mxu0 0.0
  %v293 = vand.u32 %v284, 4294901760
  %294 = vmatpush1.xpose.msra.mxu0 %v293
  %295 = vmatprep.subr.mxu0 0.0
  %v296 = vand.u32 %v281, 4294901760
  %297 = vmatpush1.xpose.msra.mxu0 %v296
  %298 = vmatprep.subr.mxu0 0.0
  %v299 = vand.u32 %v278, 4294901760
  %300 = vmatpush1.xpose.msra.mxu0 %v299
  %301 = vmatprep.subr.mxu0 0.0
  %v302 = vand.u32 %v275, 4294901760
  %303 = vmatpush1.xpose.msra.mxu0 %v302
  %304 = vmatprep.subr.mxu0 0.0
  %v305 = vand.u32 %v272, 4294901760
  %306 = vmatpush1.xpose.msra.mxu0 %v305
  %307 = vmatprep.subr.mxu0 0.0
  %v308 = vand.u32 %v269, 4294901760
  %309 = vmatpush1.xpose.msra.mxu0 %v308
  %310 = vmatprep.subr.mxu0 0.0
  %v311 = vand.u32 %v266, 4294901760
  %312 = vmatpush1.xpose.msra.mxu0 %v311
  %313 = vmatprep.subr.mxu0 0.0
  %v314 = vand.u32 %v263, 4294901760
  %315 = vmatpush1.xpose.msra.mxu0 %v314
  %316 = vmatprep.subr.mxu0 0.0
  %v317 = vand.u32 %v260, 4294901760
  %318 = vmatpush1.xpose.msra.mxu0 %v317
  %319 = vmatprep.subr.mxu0 0.0
  %v320 = vand.u32 %v257, 4294901760
  %321 = vmatpush1.xpose.msra.mxu0 %v320
  %322 = vmatprep.subr.mxu0 0.0
  %v323 = vand.u32 %v254, 4294901760
  %324 = vmatpush1.xpose.msra.mxu0 %v323
  %325 = vmatprep.subr.mxu0 0.0
  %v326 = vand.u32 %v251, 4294901760
  %327 = vmatpush1.xpose.msra.mxu0 %v326
  %328 = vmatprep.subr.mxu0 0.0
  %v329 = vand.u32 %v248, 4294901760
  %330 = vmatpush1.xpose.msra.mxu0 %v329
  %331 = vmatprep.subr.mxu0 0.0
  %v332 = vand.u32 %v245, 4294901760
  %333 = vmatpush1.xpose.msra.mxu0 %v332
  %334 = vmatprep.subr.mxu0 0.0
  %v335 = vand.u32 %v242, 4294901760
  %336 = vmatpush1.xpose.msra.mxu0 %v335
  %337 = vmatprep.subr.mxu0 0.0
  %338 = vmatpush2.xpose.msra.mxu0 0.0
  %339 = vmatprep.subr.mxu0 0.0
  %340 = vmatpush2.xpose.msra.mxu0 0.0
  %341 = vmatprep.subr.mxu0 0.0
  %342 = vmatpush2.xpose.msra.mxu0 0.0
  %343 = vmatprep.subr.mxu0 0.0
  %344 = vmatpush2.xpose.msra.mxu0 0.0
  %345 = vmatprep.subr.mxu0 0.0
  %346 = vmatpush2.xpose.msra.mxu0 0.0
  %347 = vmatprep.subr.mxu0 0.0
  %348 = vmatpush2.xpose.msra.mxu0 0.0
  %349 = vmatprep.subr.mxu0 0.0
  %350 = vmatpush2.xpose.msra.mxu0 0.0
  %351 = vmatprep.subr.mxu0 0.0
  %352 = vmatpush2.xpose.msra.mxu0 0.0
  %353 = vmatprep.subr.mxu0 0.0
  %354 = vmatpush2.xpose.msra.mxu0 0.0
  %355 = vmatprep.subr.mxu0 0.0
  %356 = vmatpush2.xpose.msra.mxu0 0.0
  %357 = vmatprep.subr.mxu0 0.0
  %358 = vmatpush2.xpose.msra.mxu0 0.0
  %359 = vmatprep.subr.mxu0 0.0
  %360 = vmatpush2.xpose.msra.mxu0 0.0
  %361 = vmatprep.subr.mxu0 0.0
  %362 = vmatpush2.xpose.msra.mxu0 0.0
  %363 = vmatprep.subr.mxu0 0.0
  %364 = vmatpush2.xpose.msra.mxu0 0.0
  %365 = vmatprep.subr.mxu0 0.0
  %366 = vmatpush2.xpose.msra.mxu0 0.0
  %367 = vmatprep.subr.mxu0 0.0
  %368 = vmatpush2.xpose.msra.mxu0 0.0
  %369 = vmatprep.mubr.f32.mxu0 0.0
  %v370 = vand.u32 %v194, 4294901760
  %v371 = vsub.f32 %v194, %v370
  %v372 = vand.u32 %v371, 4294901760
  %v373 = vsub.f32 %v371, %v372
  %v374 = vand.u32 %v373, 4294901760
  %375 = vmatmul.mubr.f32.gmra.mxu0 %v374
  %v376 = vpop.f32.mrf.mxu0
  %v377 = vadd.f32 0.0, %v376
  %v378 = vpop.f32.mrf.mxu0
  %379 = vmatprep.mubr.f32.mxu0 0.0
  %v380 = vand.u32 %v197, 4294901760
  %v381 = vsub.f32 %v197, %v380
  %v382 = vand.u32 %v381, 4294901760
  %v383 = vsub.f32 %v381, %v382
  %v384 = vand.u32 %v383, 4294901760
  %385 = vmatmul.mubr.f32.gmra.mxu0 %v384
  %v386 = vpop.f32.mrf.mxu0
  %v387 = vadd.f32 0.0, %v386
  %v388 = vpop.f32.mrf.mxu0
  %389 = vmatprep.mubr.f32.mxu0 0.0
  %v390 = vand.u32 %v200, 4294901760
  %v391 = vsub.f32 %v200, %v390
  %v392 = vand.u32 %v391, 4294901760
  %v393 = vsub.f32 %v391, %v392
  %v394 = vand.u32 %v393, 4294901760
  %395 = vmatmul.mubr.f32.gmra.mxu0 %v394
  %v396 = vpop.f32.mrf.mxu0
  %v397 = vadd.f32 0.0, %v396
  %v398 = vpop.f32.mrf.mxu0
  %399 = vmatprep.mubr.f32.mxu0 0.0
  %v400 = vand.u32 %v203, 4294901760
  %v401 = vsub.f32 %v203, %v400
  %v402 = vand.u32 %v401, 4294901760
  %v403 = vsub.f32 %v401, %v402
  %v404 = vand.u32 %v403, 4294901760
  %405 = vmatmul.mubr.f32.gmra.mxu0 %v404
  %v406 = vpop.f32.mrf.mxu0
  %v407 = vadd.f32 0.0, %v406
  %v408 = vpop.f32.mrf.mxu0
  %409 = vmatprep.mubr.f32.mxu0 0.0
  %v410 = vand.u32 %v206, 4294901760
  %v411 = vsub.f32 %v206, %v410
  %v412 = vand.u32 %v411, 4294901760
  %v413 = vsub.f32 %v411, %v412
  %v414 = vand.u32 %v413, 4294901760
  %415 = vmatmul.mubr.f32.gmra.mxu0 %v414
  %v416 = vpop.f32.mrf.mxu0
  %v417 = vadd.f32 0.0, %v416
  %v418 = vpop.f32.mrf.mxu0
  %419 = vmatprep.mubr.f32.mxu0 0.0
  %v420 = vand.u32 %v209, 4294901760
  %v421 = vsub.f32 %v209, %v420
  %v422 = vand.u32 %v421, 4294901760
  %v423 = vsub.f32 %v421, %v422
  %v424 = vand.u32 %v423, 4294901760
  %425 = vmatmul.mubr.f32.gmra.mxu0 %v424
  %v426 = vpop.f32.mrf.mxu0
  %v427 = vadd.f32 0.0, %v426
  %v428 = vpop.f32.mrf.mxu0
  %429 = vmatprep.mubr.f32.mxu0 0.0
  %v430 = vand.u32 %v212, 4294901760
  %v431 = vsub.f32 %v212, %v430
  %v432 = vand.u32 %v431, 4294901760
  %v433 = vsub.f32 %v431, %v432
  %v434 = vand.u32 %v433, 4294901760
  %435 = vmatmul.mubr.f32.gmra.mxu0 %v434
  %v436 = vpop.f32.mrf.mxu0
  %v437 = vadd.f32 0.0, %v436
  %v438 = vpop.f32.mrf.mxu0
  %439 = vmatprep.mubr.f32.mxu0 0.0
  %v440 = vand.u32 %v215, 4294901760
  %v441 = vsub.f32 %v215, %v440
  %v442 = vand.u32 %v441, 4294901760
  %v443 = vsub.f32 %v441, %v442
  %v444 = vand.u32 %v443, 4294901760
  %445 = vmatmul.mubr.f32.gmra.mxu0 %v444
  %v446 = vpop.f32.mrf.mxu0
  %v447 = vadd.f32 0.0, %v446
  %v448 = vpop.f32.mrf.mxu0
  %449 = vmatprep.mubr.f32.mxu0 0.0
  %v450 = vand.u32 %v218, 4294901760
  %v451 = vsub.f32 %v218, %v450
  %v452 = vand.u32 %v451, 4294901760
  %v453 = vsub.f32 %v451, %v452
  %v454 = vand.u32 %v453, 4294901760
  %455 = vmatmul.mubr.f32.gmra.mxu0 %v454
  %v456 = vpop.f32.mrf.mxu0
  %v457 = vadd.f32 0.0, %v456
  %v458 = vpop.f32.mrf.mxu0
  %459 = vmatprep.mubr.f32.mxu0 0.0
  %v460 = vand.u32 %v221, 4294901760
  %v461 = vsub.f32 %v221, %v460
  %v462 = vand.u32 %v461, 4294901760
  %v463 = vsub.f32 %v461, %v462
  %v464 = vand.u32 %v463, 4294901760
  %465 = vmatmul.mubr.f32.gmra.mxu0 %v464
  %v466 = vpop.f32.mrf.mxu0
  %v467 = vadd.f32 0.0, %v466
  %v468 = vpop.f32.mrf.mxu0
  %469 = vmatprep.mubr.f32.mxu0 0.0
  %v470 = vand.u32 %v224, 4294901760
  %v471 = vsub.f32 %v224, %v470
  %v472 = vand.u32 %v471, 4294901760
  %v473 = vsub.f32 %v471, %v472
  %v474 = vand.u32 %v473, 4294901760
  %475 = vmatmul.mubr.f32.gmra.mxu0 %v474
  %v476 = vpop.f32.mrf.mxu0
  %v477 = vadd.f32 0.0, %v476
  %v478 = vpop.f32.mrf.mxu0
  %479 = vmatprep.mubr.f32.mxu0 0.0
  %v480 = vand.u32 %v227, 4294901760
  %v481 = vsub.f32 %v227, %v480
  %v482 = vand.u32 %v481, 4294901760
  %v483 = vsub.f32 %v481, %v482
  %v484 = vand.u32 %v483, 4294901760
  %485 = vmatmul.mubr.f32.gmra.mxu0 %v484
  %v486 = vpop.f32.mrf.mxu0
  %v487 = vadd.f32 0.0, %v486
  %v488 = vpop.f32.mrf.mxu0
  %489 = vmatprep.mubr.f32.mxu0 0.0
  %v490 = vand.u32 %v230, 4294901760
  %v491 = vsub.f32 %v230, %v490
  %v492 = vand.u32 %v491, 4294901760
  %v493 = vsub.f32 %v491, %v492
  %v494 = vand.u32 %v493, 4294901760
  %495 = vmatmul.mubr.f32.gmra.mxu0 %v494
  %v496 = vpop.f32.mrf.mxu0
  %v497 = vadd.f32 0.0, %v496
  %v498 = vpop.f32.mrf.mxu0
  %499 = vmatprep.mubr.f32.mxu0 0.0
  %v500 = vand.u32 %v233, 4294901760
  %v501 = vsub.f32 %v233, %v500
  %v502 = vand.u32 %v501, 4294901760
  %v503 = vsub.f32 %v501, %v502
  %v504 = vand.u32 %v503, 4294901760
  %505 = vmatmul.mubr.f32.gmra.mxu0 %v504
  %v506 = vpop.f32.mrf.mxu0
  %v507 = vadd.f32 0.0, %v506
  %v508 = vpop.f32.mrf.mxu0
  %509 = vmatprep.mubr.f32.mxu0 0.0
  %v510 = vand.u32 %v236, 4294901760
  %v511 = vsub.f32 %v236, %v510
  %v512 = vand.u32 %v511, 4294901760
  %v513 = vsub.f32 %v511, %v512
  %v514 = vand.u32 %v513, 4294901760
  %515 = vmatmul.mubr.f32.gmra.mxu0 %v514
  %v516 = vpop.f32.mrf.mxu0
  %v517 = vadd.f32 0.0, %v516
  %v518 = vpop.f32.mrf.mxu0
  %519 = vmatprep.mubr.f32.mxu0 0.0
  %v520 = vand.u32 %v239, 4294901760
  %v521 = vsub.f32 %v239, %v520
  %v522 = vand.u32 %v521, 4294901760
  %v523 = vsub.f32 %v521, %v522
  %v524 = vand.u32 %v523, 4294901760
  %525 = vmatmul.mubr.f32.gmra.mxu0 %v524
  %v526 = vpop.f32.mrf.mxu0
  %v527 = vadd.f32 0.0, %v526
  %v528 = vpop.f32.mrf.mxu0
  %529 = vdwg.mxu0
  %530 = vmatprep.subr.mxu0 0.0
  %v531 = vand.u32 %v287, 4294901760
  %v532 = vsub.f32 %v287, %v531
  %v533 = vand.u32 %v532, 4294901760
  %v534 = vsub.f32 %v532, %v533
  %v535 = vand.u32 %v534, 4294901760
  %536 = vmatpush1.xpose.msra.mxu0 %v535
  %537 = vmatprep.subr.mxu0 0.0
  %v538 = vand.u32 %v284, 4294901760
  %v539 = vsub.f32 %v284, %v538
  %v540 = vand.u32 %v539, 4294901760
  %v541 = vsub.f32 %v539, %v540
  %v542 = vand.u32 %v541, 4294901760
  %543 = vmatpush1.xpose.msra.mxu0 %v542
  %544 = vmatprep.subr.mxu0 0.0
  %v545 = vand.u32 %v281, 4294901760
  %v546 = vsub.f32 %v281, %v545
  %v547 = vand.u32 %v546, 4294901760
  %v548 = vsub.f32 %v546, %v547
  %v549 = vand.u32 %v548, 4294901760
  %550 = vmatpush1.xpose.msra.mxu0 %v549
  %551 = vmatprep.subr.mxu0 0.0
  %v552 = vand.u32 %v278, 4294901760
  %v553 = vsub.f32 %v278, %v552
  %v554 = vand.u32 %v553, 4294901760
  %v555 = vsub.f32 %v553, %v554
  %v556 = vand.u32 %v555, 4294901760
  %557 = vmatpush1.xpose.msra.mxu0 %v556
  %558 = vmatprep.subr.mxu0 0.0
  %v559 = vand.u32 %v275, 4294901760
  %v560 = vsub.f32 %v275, %v559
  %v561 = vand.u32 %v560, 4294901760
  %v562 = vsub.f32 %v560, %v561
  %v563 = vand.u32 %v562, 4294901760
  %564 = vmatpush1.xpose.msra.mxu0 %v563
  %565 = vmatprep.subr.mxu0 0.0
  %v566 = vand.u32 %v272, 4294901760
  %v567 = vsub.f32 %v272, %v566
  %v568 = vand.u32 %v567, 4294901760
  %v569 = vsub.f32 %v567, %v568
  %v570 = vand.u32 %v569, 4294901760
  %571 = vmatpush1.xpose.msra.mxu0 %v570
  %572 = vmatprep.subr.mxu0 0.0
  %v573 = vand.u32 %v269, 4294901760
  %v574 = vsub.f32 %v269, %v573
  %v575 = vand.u32 %v574, 4294901760
  %v576 = vsub.f32 %v574, %v575
  %v577 = vand.u32 %v576, 4294901760
  %578 = vmatpush1.xpose.msra.mxu0 %v577
  %579 = vmatprep.subr.mxu0 0.0
  %v580 = vand.u32 %v266, 4294901760
  %v581 = vsub.f32 %v266, %v580
  %v582 = vand.u32 %v581, 4294901760
  %v583 = vsub.f32 %v581, %v582
  %v584 = vand.u32 %v583, 4294901760
  %585 = vmatpush1.xpose.msra.mxu0 %v584
  %586 = vmatprep.subr.mxu0 0.0
  %v587 = vand.u32 %v263, 4294901760
  %v588 = vsub.f32 %v263, %v587
  %v589 = vand.u32 %v588, 4294901760
  %v590 = vsub.f32 %v588, %v589
  %v591 = vand.u32 %v590, 4294901760
  %592 = vmatpush1.xpose.msra.mxu0 %v591
  %593 = vmatprep.subr.mxu0 0.0
  %v594 = vand.u32 %v260, 4294901760
  %v595 = vsub.f32 %v260, %v594
  %v596 = vand.u32 %v595, 4294901760
  %v597 = vsub.f32 %v595, %v596
  %v598 = vand.u32 %v597, 4294901760
  %599 = vmatpush1.xpose.msra.mxu0 %v598
  %600 = vmatprep.subr.mxu0 0.0
  %v601 = vand.u32 %v257, 4294901760
  %v602 = vsub.f32 %v257, %v601
  %v603 = vand.u32 %v602, 4294901760
  %v604 = vsub.f32 %v602, %v603
  %v605 = vand.u32 %v604, 4294901760
  %606 = vmatpush1.xpose.msra.mxu0 %v605
  %607 = vmatprep.subr.mxu0 0.0
  %v608 = vand.u32 %v254, 4294901760
  %v609 = vsub.f32 %v254, %v608
  %v610 = vand.u32 %v609, 4294901760
  %v611 = vsub.f32 %v609, %v610
  %v612 = vand.u32 %v611, 4294901760
  %613 = vmatpush1.xpose.msra.mxu0 %v612
  %614 = vmatprep.subr.mxu0 0.0
  %v615 = vand.u32 %v251, 4294901760
  %v616 = vsub.f32 %v251, %v615
  %v617 = vand.u32 %v616, 4294901760
  %v618 = vsub.f32 %v616, %v617
  %v619 = vand.u32 %v618, 4294901760
  %620 = vmatpush1.xpose.msra.mxu0 %v619
  %621 = vmatprep.subr.mxu0 0.0
  %v622 = vand.u32 %v248, 4294901760
  %v623 = vsub.f32 %v248, %v622
  %v624 = vand.u32 %v623, 4294901760
  %v625 = vsub.f32 %v623, %v624
  %v626 = vand.u32 %v625, 4294901760
  %627 = vmatpush1.xpose.msra.mxu0 %v626
  %628 = vmatprep.subr.mxu0 0.0
  %v629 = vand.u32 %v245, 4294901760
  %v630 = vsub.f32 %v245, %v629
  %v631 = vand.u32 %v630, 4294901760
  %v632 = vsub.f32 %v630, %v631
  %v633 = vand.u32 %v632, 4294901760
  %634 = vmatpush1.xpose.msra.mxu0 %v633
  %635 = vmatprep.subr.mxu0 0.0
  %v636 = vand.u32 %v242, 4294901760
  %v637 = vsub.f32 %v242, %v636
  %v638 = vand.u32 %v637, 4294901760
  %v639 = vsub.f32 %v637, %v638
  %v640 = vand.u32 %v639, 4294901760
  %641 = vmatpush1.xpose.msra.mxu0 %v640
  %642 = vmatprep.subr.mxu0 0.0
  %643 = vmatpush2.xpose.msra.mxu0 0.0
  %644 = vmatprep.subr.mxu0 0.0
  %645 = vmatpush2.xpose.msra.mxu0 0.0
  %646 = vmatprep.subr.mxu0 0.0
  %647 = vmatpush2.xpose.msra.mxu0 0.0
  %648 = vmatprep.subr.mxu0 0.0
  %649 = vmatpush2.xpose.msra.mxu0 0.0
  %650 = vmatprep.subr.mxu0 0.0
  %651 = vmatpush2.xpose.msra.mxu0 0.0
  %652 = vmatprep.subr.mxu0 0.0
  %653 = vmatpush2.xpose.msra.mxu0 0.0
  %654 = vmatprep.subr.mxu0 0.0
  %655 = vmatpush2.xpose.msra.mxu0 0.0
  %656 = vmatprep.subr.mxu0 0.0
  %657 = vmatpush2.xpose.msra.mxu0 0.0
  %658 = vmatprep.subr.mxu0 0.0
  %659 = vmatpush2.xpose.msra.mxu0 0.0
  %660 = vmatprep.subr.mxu0 0.0
  %661 = vmatpush2.xpose.msra.mxu0 0.0
  %662 = vmatprep.subr.mxu0 0.0
  %663 = vmatpush2.xpose.msra.mxu0 0.0
  %664 = vmatprep.subr.mxu0 0.0
  %665 = vmatpush2.xpose.msra.mxu0 0.0
  %666 = vmatprep.subr.mxu0 0.0
  %667 = vmatpush2.xpose.msra.mxu0 0.0
  %668 = vmatprep.subr.mxu0 0.0
  %669 = vmatpush2.xpose.msra.mxu0 0.0
  %670 = vmatprep.subr.mxu0 0.0
  %671 = vmatpush2.xpose.msra.mxu0 0.0
  %672 = vmatprep.subr.mxu0 0.0
  %673 = vmatpush2.xpose.msra.mxu0 0.0
  %674 = vmatprep.mubr.f32.mxu0 0.0
  %v675 = vand.u32 %v194, 4294901760
  %676 = vmatmul.mubr.f32.gmra.mxu0 %v675
  %v677 = vpop.f32.mrf.mxu0
  %v678 = vadd.f32 %v377, %v677
  %v679 = vpop.f32.mrf.mxu0
  %680 = vmatprep.mubr.f32.mxu0 0.0
  %v681 = vand.u32 %v197, 4294901760
  %682 = vmatmul.mubr.f32.gmra.mxu0 %v681
  %v683 = vpop.f32.mrf.mxu0
  %v684 = vadd.f32 %v387, %v683
  %v685 = vpop.f32.mrf.mxu0
  %686 = vmatprep.mubr.f32.mxu0 0.0
  %v687 = vand.u32 %v200, 4294901760
  %688 = vmatmul.mubr.f32.gmra.mxu0 %v687
  %v689 = vpop.f32.mrf.mxu0
  %v690 = vadd.f32 %v397, %v689
  %v691 = vpop.f32.mrf.mxu0
  %692 = vmatprep.mubr.f32.mxu0 0.0
  %v693 = vand.u32 %v203, 4294901760
  %694 = vmatmul.mubr.f32.gmra.mxu0 %v693
  %v695 = vpop.f32.mrf.mxu0
  %v696 = vadd.f32 %v407, %v695
  %v697 = vpop.f32.mrf.mxu0
  %698 = vmatprep.mubr.f32.mxu0 0.0
  %v699 = vand.u32 %v206, 4294901760
  %700 = vmatmul.mubr.f32.gmra.mxu0 %v699
  %v701 = vpop.f32.mrf.mxu0
  %v702 = vadd.f32 %v417, %v701
  %v703 = vpop.f32.mrf.mxu0
  %704 = vmatprep.mubr.f32.mxu0 0.0
  %v705 = vand.u32 %v209, 4294901760
  %706 = vmatmul.mubr.f32.gmra.mxu0 %v705
  %v707 = vpop.f32.mrf.mxu0
  %v708 = vadd.f32 %v427, %v707
  %v709 = vpop.f32.mrf.mxu0
  %710 = vmatprep.mubr.f32.mxu0 0.0
  %v711 = vand.u32 %v212, 4294901760
  %712 = vmatmul.mubr.f32.gmra.mxu0 %v711
  %v713 = vpop.f32.mrf.mxu0
  %v714 = vadd.f32 %v437, %v713
  %v715 = vpop.f32.mrf.mxu0
  %716 = vmatprep.mubr.f32.mxu0 0.0
  %v717 = vand.u32 %v215, 4294901760
  %718 = vmatmul.mubr.f32.gmra.mxu0 %v717
  %v719 = vpop.f32.mrf.mxu0
  %v720 = vadd.f32 %v447, %v719
  %v721 = vpop.f32.mrf.mxu0
  %722 = vmatprep.mubr.f32.mxu0 0.0
  %v723 = vand.u32 %v218, 4294901760
  %724 = vmatmul.mubr.f32.gmra.mxu0 %v723
  %v725 = vpop.f32.mrf.mxu0
  %v726 = vadd.f32 %v457, %v725
  %v727 = vpop.f32.mrf.mxu0
  %728 = vmatprep.mubr.f32.mxu0 0.0
  %v729 = vand.u32 %v221, 4294901760
  %730 = vmatmul.mubr.f32.gmra.mxu0 %v729
  %v731 = vpop.f32.mrf.mxu0
  %v732 = vadd.f32 %v467, %v731
  %v733 = vpop.f32.mrf.mxu0
  %734 = vmatprep.mubr.f32.mxu0 0.0
  %v735 = vand.u32 %v224, 4294901760
  %736 = vmatmul.mubr.f32.gmra.mxu0 %v735
  %v737 = vpop.f32.mrf.mxu0
  %v738 = vadd.f32 %v477, %v737
  %v739 = vpop.f32.mrf.mxu0
  %740 = vmatprep.mubr.f32.mxu0 0.0
  %v741 = vand.u32 %v227, 4294901760
  %742 = vmatmul.mubr.f32.gmra.mxu0 %v741
  %v743 = vpop.f32.mrf.mxu0
  %v744 = vadd.f32 %v487, %v743
  %v745 = vpop.f32.mrf.mxu0
  %746 = vmatprep.mubr.f32.mxu0 0.0
  %v747 = vand.u32 %v230, 4294901760
  %748 = vmatmul.mubr.f32.gmra.mxu0 %v747
  %v749 = vpop.f32.mrf.mxu0
  %v750 = vadd.f32 %v497, %v749
  %v751 = vpop.f32.mrf.mxu0
  %752 = vmatprep.mubr.f32.mxu0 0.0
  %v753 = vand.u32 %v233, 4294901760
  %754 = vmatmul.mubr.f32.gmra.mxu0 %v753
  %v755 = vpop.f32.mrf.mxu0
  %v756 = vadd.f32 %v507, %v755
  %v757 = vpop.f32.mrf.mxu0
  %758 = vmatprep.mubr.f32.mxu0 0.0
  %v759 = vand.u32 %v236, 4294901760
  %760 = vmatmul.mubr.f32.gmra.mxu0 %v759
  %v761 = vpop.f32.mrf.mxu0
  %v762 = vadd.f32 %v517, %v761
  %v763 = vpop.f32.mrf.mxu0
  %764 = vmatprep.mubr.f32.mxu0 0.0
  %v765 = vand.u32 %v239, 4294901760
  %766 = vmatmul.mubr.f32.gmra.mxu0 %v765
  %v767 = vpop.f32.mrf.mxu0
  %v768 = vadd.f32 %v527, %v767
  %v769 = vpop.f32.mrf.mxu0
  %770 = vdwg.mxu0
  %771 = vmatprep.subr.mxu0 0.0
  %v772 = vand.u32 %v287, 4294901760
  %v773 = vsub.f32 %v287, %v772
  %774 = vmatpush1.xpose.msra.mxu0 %v773
  %775 = vmatprep.subr.mxu0 0.0
  %v776 = vand.u32 %v284, 4294901760
  %v777 = vsub.f32 %v284, %v776
  %778 = vmatpush1.xpose.msra.mxu0 %v777
  %779 = vmatprep.subr.mxu0 0.0
  %v780 = vand.u32 %v281, 4294901760
  %v781 = vsub.f32 %v281, %v780
  %782 = vmatpush1.xpose.msra.mxu0 %v781
  %783 = vmatprep.subr.mxu0 0.0
  %v784 = vand.u32 %v278, 4294901760
  %v785 = vsub.f32 %v278, %v784
  %786 = vmatpush1.xpose.msra.mxu0 %v785
  %787 = vmatprep.subr.mxu0 0.0
  %v788 = vand.u32 %v275, 4294901760
  %v789 = vsub.f32 %v275, %v788
  %790 = vmatpush1.xpose.msra.mxu0 %v789
  %791 = vmatprep.subr.mxu0 0.0
  %v792 = vand.u32 %v272, 4294901760
  %v793 = vsub.f32 %v272, %v792
  %794 = vmatpush1.xpose.msra.mxu0 %v793
  %795 = vmatprep.subr.mxu0 0.0
  %v796 = vand.u32 %v269, 4294901760
  %v797 = vsub.f32 %v269, %v796
  %798 = vmatpush1.xpose.msra.mxu0 %v797
  %799 = vmatprep.subr.mxu0 0.0
  %v800 = vand.u32 %v266, 4294901760
  %v801 = vsub.f32 %v266, %v800
  %802 = vmatpush1.xpose.msra.mxu0 %v801
  %803 = vmatprep.subr.mxu0 0.0
  %v804 = vand.u32 %v263, 4294901760
  %v805 = vsub.f32 %v263, %v804
  %806 = vmatpush1.xpose.msra.mxu0 %v805
  %807 = vmatprep.subr.mxu0 0.0
  %v808 = vand.u32 %v260, 4294901760
  %v809 = vsub.f32 %v260, %v808
  %810 = vmatpush1.xpose.msra.mxu0 %v809
  %811 = vmatprep.subr.mxu0 0.0
  %v812 = vand.u32 %v257, 4294901760
  %v813 = vsub.f32 %v257, %v812
  %814 = vmatpush1.xpose.msra.mxu0 %v813
  %815 = vmatprep.subr.mxu0 0.0
  %v816 = vand.u32 %v254, 4294901760
  %v817 = vsub.f32 %v254, %v816
  %818 = vmatpush1.xpose.msra.mxu0 %v817
  %819 = vmatprep.subr.mxu0 0.0
  %v820 = vand.u32 %v251, 4294901760
  %v821 = vsub.f32 %v251, %v820
  %822 = vmatpush1.xpose.msra.mxu0 %v821
  %823 = vmatprep.subr.mxu0 0.0
  %v824 = vand.u32 %v248, 4294901760
  %v825 = vsub.f32 %v248, %v824
  %826 = vmatpush1.xpose.msra.mxu0 %v825
  %827 = vmatprep.subr.mxu0 0.0
  %v828 = vand.u32 %v245, 4294901760
  %v829 = vsub.f32 %v245, %v828
  %830 = vmatpush1.xpose.msra.mxu0 %v829
  %831 = vmatprep.subr.mxu0 0.0
  %v832 = vand.u32 %v242, 4294901760
  %v833 = vsub.f32 %v242, %v832
  %834 = vmatpush1.xpose.msra.mxu0 %v833
  %835 = vmatprep.subr.mxu0 0.0
  %836 = vmatpush2.xpose.msra.mxu0 0.0
  %837 = vmatprep.subr.mxu0 0.0
  %838 = vmatpush2.xpose.msra.mxu0 0.0
  %839 = vmatprep.subr.mxu0 0.0
  %840 = vmatpush2.xpose.msra.mxu0 0.0
  %841 = vmatprep.subr.mxu0 0.0
  %842 = vmatpush2.xpose.msra.mxu0 0.0
  %843 = vmatprep.subr.mxu0 0.0
  %844 = vmatpush2.xpose.msra.mxu0 0.0
  %845 = vmatprep.subr.mxu0 0.0
  %846 = vmatpush2.xpose.msra.mxu0 0.0
  %847 = vmatprep.subr.mxu0 0.0
  %848 = vmatpush2.xpose.msra.mxu0 0.0
  %849 = vmatprep.subr.mxu0 0.0
  %850 = vmatpush2.xpose.msra.mxu0 0.0
  %851 = vmatprep.subr.mxu0 0.0
  %852 = vmatpush2.xpose.msra.mxu0 0.0
  %853 = vmatprep.subr.mxu0 0.0
  %854 = vmatpush2.xpose.msra.mxu0 0.0
  %855 = vmatprep.subr.mxu0 0.0
  %856 = vmatpush2.xpose.msra.mxu0 0.0
  %857 = vmatprep.subr.mxu0 0.0
  %858 = vmatpush2.xpose.msra.mxu0 0.0
  %859 = vmatprep.subr.mxu0 0.0
  %860 = vmatpush2.xpose.msra.mxu0 0.0
  %861 = vmatprep.subr.mxu0 0.0
  %862 = vmatpush2.xpose.msra.mxu0 0.0
  %863 = vmatprep.subr.mxu0 0.0
  %864 = vmatpush2.xpose.msra.mxu0 0.0
  %865 = vmatprep.subr.mxu0 0.0
  %866 = vmatpush2.xpose.msra.mxu0 0.0
  %867 = vmatprep.mubr.f32.mxu0 0.0
  %v868 = vand.u32 %v194, 4294901760
  %v869 = vsub.f32 %v194, %v868
  %870 = vmatmul.mubr.f32.gmra.mxu0 %v869
  %v871 = vpop.f32.mrf.mxu0
  %v872 = vadd.f32 %v678, %v871
  %v873 = vpop.f32.mrf.mxu0
  %874 = vmatprep.mubr.f32.mxu0 0.0
  %v875 = vand.u32 %v197, 4294901760
  %v876 = vsub.f32 %v197, %v875
  %877 = vmatmul.mubr.f32.gmra.mxu0 %v876
  %v878 = vpop.f32.mrf.mxu0
  %v879 = vadd.f32 %v684, %v878
  %v880 = vpop.f32.mrf.mxu0
  %881 = vmatprep.mubr.f32.mxu0 0.0
  %v882 = vand.u32 %v200, 4294901760
  %v883 = vsub.f32 %v200, %v882
  %884 = vmatmul.mubr.f32.gmra.mxu0 %v883
  %v885 = vpop.f32.mrf.mxu0
  %v886 = vadd.f32 %v690, %v885
  %v887 = vpop.f32.mrf.mxu0
  %888 = vmatprep.mubr.f32.mxu0 0.0
  %v889 = vand.u32 %v203, 4294901760
  %v890 = vsub.f32 %v203, %v889
  %891 = vmatmul.mubr.f32.gmra.mxu0 %v890
  %v892 = vpop.f32.mrf.mxu0
  %v893 = vadd.f32 %v696, %v892
  %v894 = vpop.f32.mrf.mxu0
  %895 = vmatprep.mubr.f32.mxu0 0.0
  %v896 = vand.u32 %v206, 4294901760
  %v897 = vsub.f32 %v206, %v896
  %898 = vmatmul.mubr.f32.gmra.mxu0 %v897
  %v899 = vpop.f32.mrf.mxu0
  %v900 = vadd.f32 %v702, %v899
  %v901 = vpop.f32.mrf.mxu0
  %902 = vmatprep.mubr.f32.mxu0 0.0
  %v903 = vand.u32 %v209, 4294901760
  %v904 = vsub.f32 %v209, %v903
  %905 = vmatmul.mubr.f32.gmra.mxu0 %v904
  %v906 = vpop.f32.mrf.mxu0
  %v907 = vadd.f32 %v708, %v906
  %v908 = vpop.f32.mrf.mxu0
  %909 = vmatprep.mubr.f32.mxu0 0.0
  %v910 = vand.u32 %v212, 4294901760
  %v911 = vsub.f32 %v212, %v910
  %912 = vmatmul.mubr.f32.gmra.mxu0 %v911
  %v913 = vpop.f32.mrf.mxu0
  %v914 = vadd.f32 %v714, %v913
  %v915 = vpop.f32.mrf.mxu0
  %916 = vmatprep.mubr.f32.mxu0 0.0
  %v917 = vand.u32 %v215, 4294901760
  %v918 = vsub.f32 %v215, %v917
  %919 = vmatmul.mubr.f32.gmra.mxu0 %v918
  %v920 = vpop.f32.mrf.mxu0
  %v921 = vadd.f32 %v720, %v920
  %v922 = vpop.f32.mrf.mxu0
  %923 = vmatprep.mubr.f32.mxu0 0.0
  %v924 = vand.u32 %v218, 4294901760
  %v925 = vsub.f32 %v218, %v924
  %926 = vmatmul.mubr.f32.gmra.mxu0 %v925
  %v927 = vpop.f32.mrf.mxu0
  %v928 = vadd.f32 %v726, %v927
  %v929 = vpop.f32.mrf.mxu0
  %930 = vmatprep.mubr.f32.mxu0 0.0
  %v931 = vand.u32 %v221, 4294901760
  %v932 = vsub.f32 %v221, %v931
  %933 = vmatmul.mubr.f32.gmra.mxu0 %v932
  %v934 = vpop.f32.mrf.mxu0
  %v935 = vadd.f32 %v732, %v934
  %v936 = vpop.f32.mrf.mxu0
  %937 = vmatprep.mubr.f32.mxu0 0.0
  %v938 = vand.u32 %v224, 4294901760
  %v939 = vsub.f32 %v224, %v938
  %940 = vmatmul.mubr.f32.gmra.mxu0 %v939
  %v941 = vpop.f32.mrf.mxu0
  %v942 = vadd.f32 %v738, %v941
  %v943 = vpop.f32.mrf.mxu0
  %944 = vmatprep.mubr.f32.mxu0 0.0
  %v945 = vand.u32 %v227, 4294901760
  %v946 = vsub.f32 %v227, %v945
  %947 = vmatmul.mubr.f32.gmra.mxu0 %v946
  %v948 = vpop.f32.mrf.mxu0
  %v949 = vadd.f32 %v744, %v948
  %v950 = vpop.f32.mrf.mxu0
  %951 = vmatprep.mubr.f32.mxu0 0.0
  %v952 = vand.u32 %v230, 4294901760
  %v953 = vsub.f32 %v230, %v952
  %954 = vmatmul.mubr.f32.gmra.mxu0 %v953
  %v955 = vpop.f32.mrf.mxu0
  %v956 = vadd.f32 %v750, %v955
  %v957 = vpop.f32.mrf.mxu0
  %958 = vmatprep.mubr.f32.mxu0 0.0
  %v959 = vand.u32 %v233, 4294901760
  %v960 = vsub.f32 %v233, %v959
  %961 = vmatmul.mubr.f32.gmra.mxu0 %v960
  %v962 = vpop.f32.mrf.mxu0
  %v963 = vadd.f32 %v756, %v962
  %v964 = vpop.f32.mrf.mxu0
  %965 = vmatprep.mubr.f32.mxu0 0.0
  %v966 = vand.u32 %v236, 4294901760
  %v967 = vsub.f32 %v236, %v966
  %968 = vmatmul.mubr.f32.gmra.mxu0 %v967
  %v969 = vpop.f32.mrf.mxu0
  %v970 = vadd.f32 %v762, %v969
  %v971 = vpop.f32.mrf.mxu0
  %972 = vmatprep.mubr.f32.mxu0 0.0
  %v973 = vand.u32 %v239, 4294901760
  %v974 = vsub.f32 %v239, %v973
  %975 = vmatmul.mubr.f32.gmra.mxu0 %v974
  %v976 = vpop.f32.mrf.mxu0
  %v977 = vadd.f32 %v768, %v976
  %v978 = vpop.f32.mrf.mxu0
  %979 = vdwg.mxu0
  %980 = vmatprep.subr.mxu0 0.0
  %v981 = vand.u32 %v287, 4294901760
  %982 = vmatpush1.xpose.msra.mxu0 %v981
  %983 = vmatprep.subr.mxu0 0.0
  %v984 = vand.u32 %v284, 4294901760
  %985 = vmatpush1.xpose.msra.mxu0 %v984
  %986 = vmatprep.subr.mxu0 0.0
  %v987 = vand.u32 %v281, 4294901760
  %988 = vmatpush1.xpose.msra.mxu0 %v987
  %989 = vmatprep.subr.mxu0 0.0
  %v990 = vand.u32 %v278, 4294901760
  %991 = vmatpush1.xpose.msra.mxu0 %v990
  %992 = vmatprep.subr.mxu0 0.0
  %v993 = vand.u32 %v275, 4294901760
  %994 = vmatpush1.xpose.msra.mxu0 %v993
  %995 = vmatprep.subr.mxu0 0.0
  %v996 = vand.u32 %v272, 4294901760
  %997 = vmatpush1.xpose.msra.mxu0 %v996
  %998 = vmatprep.subr.mxu0 0.0
  %v999 = vand.u32 %v269, 4294901760
  %1000 = vmatpush1.xpose.msra.mxu0 %v999
  %1001 = vmatprep.subr.mxu0 0.0
  %v1002 = vand.u32 %v266, 4294901760
  %1003 = vmatpush1.xpose.msra.mxu0 %v1002
  %1004 = vmatprep.subr.mxu0 0.0
  %v1005 = vand.u32 %v263, 4294901760
  %1006 = vmatpush1.xpose.msra.mxu0 %v1005
  %1007 = vmatprep.subr.mxu0 0.0
  %v1008 = vand.u32 %v260, 4294901760
  %1009 = vmatpush1.xpose.msra.mxu0 %v1008
  %1010 = vmatprep.subr.mxu0 0.0
  %v1011 = vand.u32 %v257, 4294901760
  %1012 = vmatpush1.xpose.msra.mxu0 %v1011
  %1013 = vmatprep.subr.mxu0 0.0
  %v1014 = vand.u32 %v254, 4294901760
  %1015 = vmatpush1.xpose.msra.mxu0 %v1014
  %1016 = vmatprep.subr.mxu0 0.0
  %v1017 = vand.u32 %v251, 4294901760
  %1018 = vmatpush1.xpose.msra.mxu0 %v1017
  %1019 = vmatprep.subr.mxu0 0.0
  %v1020 = vand.u32 %v248, 4294901760
  %1021 = vmatpush1.xpose.msra.mxu0 %v1020
  %1022 = vmatprep.subr.mxu0 0.0
  %v1023 = vand.u32 %v245, 4294901760
  %1024 = vmatpush1.xpose.msra.mxu0 %v1023
  %1025 = vmatprep.subr.mxu0 0.0
  %v1026 = vand.u32 %v242, 4294901760
  %1027 = vmatpush1.xpose.msra.mxu0 %v1026
  %1028 = vmatprep.subr.mxu0 0.0
  %1029 = vmatpush2.xpose.msra.mxu0 0.0
  %1030 = vmatprep.subr.mxu0 0.0
  %1031 = vmatpush2.xpose.msra.mxu0 0.0
  %1032 = vmatprep.subr.mxu0 0.0
  %1033 = vmatpush2.xpose.msra.mxu0 0.0
  %1034 = vmatprep.subr.mxu0 0.0
  %1035 = vmatpush2.xpose.msra.mxu0 0.0
  %1036 = vmatprep.subr.mxu0 0.0
  %1037 = vmatpush2.xpose.msra.mxu0 0.0
  %1038 = vmatprep.subr.mxu0 0.0
  %1039 = vmatpush2.xpose.msra.mxu0 0.0
  %1040 = vmatprep.subr.mxu0 0.0
  %1041 = vmatpush2.xpose.msra.mxu0 0.0
  %1042 = vmatprep.subr.mxu0 0.0
  %1043 = vmatpush2.xpose.msra.mxu0 0.0
  %1044 = vmatprep.subr.mxu0 0.0
  %1045 = vmatpush2.xpose.msra.mxu0 0.0
  %1046 = vmatprep.subr.mxu0 0.0
  %1047 = vmatpush2.xpose.msra.mxu0 0.0
  %1048 = vmatprep.subr.mxu0 0.0
  %1049 = vmatpush2.xpose.msra.mxu0 0.0
  %1050 = vmatprep.subr.mxu0 0.0
  %1051 = vmatpush2.xpose.msra.mxu0 0.0
  %1052 = vmatprep.subr.mxu0 0.0
  %1053 = vmatpush2.xpose.msra.mxu0 0.0
  %1054 = vmatprep.subr.mxu0 0.0
  %1055 = vmatpush2.xpose.msra.mxu0 0.0
  %1056 = vmatprep.subr.mxu0 0.0
  %1057 = vmatpush2.xpose.msra.mxu0 0.0
  %1058 = vmatprep.subr.mxu0 0.0
  %1059 = vmatpush2.xpose.msra.mxu0 0.0
  %1060 = vmatprep.mubr.f32.mxu0 0.0
  %v1061 = vand.u32 %v194, 4294901760
  %v1062 = vsub.f32 %v194, %v1061
  %v1063 = vand.u32 %v1062, 4294901760
  %1064 = vmatmul.mubr.f32.gmra.mxu0 %v1063
  %v1065 = vpop.f32.mrf.mxu0
  %v1066 = vadd.f32 %v872, %v1065
  %v1067 = vpop.f32.mrf.mxu0
  %1068 = vmatprep.mubr.f32.mxu0 0.0
  %v1069 = vand.u32 %v197, 4294901760
  %v1070 = vsub.f32 %v197, %v1069
  %v1071 = vand.u32 %v1070, 4294901760
  %1072 = vmatmul.mubr.f32.gmra.mxu0 %v1071
  %v1073 = vpop.f32.mrf.mxu0
  %v1074 = vadd.f32 %v879, %v1073
  %v1075 = vpop.f32.mrf.mxu0
  %1076 = vmatprep.mubr.f32.mxu0 0.0
  %v1077 = vand.u32 %v200, 4294901760
  %v1078 = vsub.f32 %v200, %v1077
  %v1079 = vand.u32 %v1078, 4294901760
  %1080 = vmatmul.mubr.f32.gmra.mxu0 %v1079
  %v1081 = vpop.f32.mrf.mxu0
  %v1082 = vadd.f32 %v886, %v1081
  %v1083 = vpop.f32.mrf.mxu0
  %1084 = vmatprep.mubr.f32.mxu0 0.0
  %v1085 = vand.u32 %v203, 4294901760
  %v1086 = vsub.f32 %v203, %v1085
  %v1087 = vand.u32 %v1086, 4294901760
  %1088 = vmatmul.mubr.f32.gmra.mxu0 %v1087
  %v1089 = vpop.f32.mrf.mxu0
  %v1090 = vadd.f32 %v893, %v1089
  %v1091 = vpop.f32.mrf.mxu0
  %1092 = vmatprep.mubr.f32.mxu0 0.0
  %v1093 = vand.u32 %v206, 4294901760
  %v1094 = vsub.f32 %v206, %v1093
  %v1095 = vand.u32 %v1094, 4294901760
  %1096 = vmatmul.mubr.f32.gmra.mxu0 %v1095
  %v1097 = vpop.f32.mrf.mxu0
  %v1098 = vadd.f32 %v900, %v1097
  %v1099 = vpop.f32.mrf.mxu0
  %1100 = vmatprep.mubr.f32.mxu0 0.0
  %v1101 = vand.u32 %v209, 4294901760
  %v1102 = vsub.f32 %v209, %v1101
  %v1103 = vand.u32 %v1102, 4294901760
  %1104 = vmatmul.mubr.f32.gmra.mxu0 %v1103
  %v1105 = vpop.f32.mrf.mxu0
  %v1106 = vadd.f32 %v907, %v1105
  %v1107 = vpop.f32.mrf.mxu0
  %1108 = vmatprep.mubr.f32.mxu0 0.0
  %v1109 = vand.u32 %v212, 4294901760
  %v1110 = vsub.f32 %v212, %v1109
  %v1111 = vand.u32 %v1110, 4294901760
  %1112 = vmatmul.mubr.f32.gmra.mxu0 %v1111
  %v1113 = vpop.f32.mrf.mxu0
  %v1114 = vadd.f32 %v914, %v1113
  %v1115 = vpop.f32.mrf.mxu0
  %1116 = vmatprep.mubr.f32.mxu0 0.0
  %v1117 = vand.u32 %v215, 4294901760
  %v1118 = vsub.f32 %v215, %v1117
  %v1119 = vand.u32 %v1118, 4294901760
  %1120 = vmatmul.mubr.f32.gmra.mxu0 %v1119
  %v1121 = vpop.f32.mrf.mxu0
  %v1122 = vadd.f32 %v921, %v1121
  %v1123 = vpop.f32.mrf.mxu0
  %1124 = vmatprep.mubr.f32.mxu0 0.0
  %v1125 = vand.u32 %v218, 4294901760
  %v1126 = vsub.f32 %v218, %v1125
  %v1127 = vand.u32 %v1126, 4294901760
  %1128 = vmatmul.mubr.f32.gmra.mxu0 %v1127
  %v1129 = vpop.f32.mrf.mxu0
  %v1130 = vadd.f32 %v928, %v1129
  %v1131 = vpop.f32.mrf.mxu0
  %1132 = vmatprep.mubr.f32.mxu0 0.0
  %v1133 = vand.u32 %v221, 4294901760
  %v1134 = vsub.f32 %v221, %v1133
  %v1135 = vand.u32 %v1134, 4294901760
  %1136 = vmatmul.mubr.f32.gmra.mxu0 %v1135
  %v1137 = vpop.f32.mrf.mxu0
  %v1138 = vadd.f32 %v935, %v1137
  %v1139 = vpop.f32.mrf.mxu0
  %1140 = vmatprep.mubr.f32.mxu0 0.0
  %v1141 = vand.u32 %v224, 4294901760
  %v1142 = vsub.f32 %v224, %v1141
  %v1143 = vand.u32 %v1142, 4294901760
  %1144 = vmatmul.mubr.f32.gmra.mxu0 %v1143
  %v1145 = vpop.f32.mrf.mxu0
  %v1146 = vadd.f32 %v942, %v1145
  %v1147 = vpop.f32.mrf.mxu0
  %1148 = vmatprep.mubr.f32.mxu0 0.0
  %v1149 = vand.u32 %v227, 4294901760
  %v1150 = vsub.f32 %v227, %v1149
  %v1151 = vand.u32 %v1150, 4294901760
  %1152 = vmatmul.mubr.f32.gmra.mxu0 %v1151
  %v1153 = vpop.f32.mrf.mxu0
  %v1154 = vadd.f32 %v949, %v1153
  %v1155 = vpop.f32.mrf.mxu0
  %1156 = vmatprep.mubr.f32.mxu0 0.0
  %v1157 = vand.u32 %v230, 4294901760
  %v1158 = vsub.f32 %v230, %v1157
  %v1159 = vand.u32 %v1158, 4294901760
  %1160 = vmatmul.mubr.f32.gmra.mxu0 %v1159
  %v1161 = vpop.f32.mrf.mxu0
  %v1162 = vadd.f32 %v956, %v1161
  %v1163 = vpop.f32.mrf.mxu0
  %1164 = vmatprep.mubr.f32.mxu0 0.0
  %v1165 = vand.u32 %v233, 4294901760
  %v1166 = vsub.f32 %v233, %v1165
  %v1167 = vand.u32 %v1166, 4294901760
  %1168 = vmatmul.mubr.f32.gmra.mxu0 %v1167
  %v1169 = vpop.f32.mrf.mxu0
  %v1170 = vadd.f32 %v963, %v1169
  %v1171 = vpop.f32.mrf.mxu0
  %1172 = vmatprep.mubr.f32.mxu0 0.0
  %v1173 = vand.u32 %v236, 4294901760
  %v1174 = vsub.f32 %v236, %v1173
  %v1175 = vand.u32 %v1174, 4294901760
  %1176 = vmatmul.mubr.f32.gmra.mxu0 %v1175
  %v1177 = vpop.f32.mrf.mxu0
  %v1178 = vadd.f32 %v970, %v1177
  %v1179 = vpop.f32.mrf.mxu0
  %1180 = vmatprep.mubr.f32.mxu0 0.0
  %v1181 = vand.u32 %v239, 4294901760
  %v1182 = vsub.f32 %v239, %v1181
  %v1183 = vand.u32 %v1182, 4294901760
  %1184 = vmatmul.mubr.f32.gmra.mxu0 %v1183
  %v1185 = vpop.f32.mrf.mxu0
  %v1186 = vadd.f32 %v977, %v1185
  %v1187 = vpop.f32.mrf.mxu0
  %1188 = vdwg.mxu0
  %1189 = vmatprep.subr.mxu0 0.0
  %v1190 = vand.u32 %v287, 4294901760
  %v1191 = vsub.f32 %v287, %v1190
  %v1192 = vand.u32 %v1191, 4294901760
  %1193 = vmatpush1.xpose.msra.mxu0 %v1192
  %1194 = vmatprep.subr.mxu0 0.0
  %v1195 = vand.u32 %v284, 4294901760
  %v1196 = vsub.f32 %v284, %v1195
  %v1197 = vand.u32 %v1196, 4294901760
  %1198 = vmatpush1.xpose.msra.mxu0 %v1197
  %1199 = vmatprep.subr.mxu0 0.0
  %v1200 = vand.u32 %v281, 4294901760
  %v1201 = vsub.f32 %v281, %v1200
  %v1202 = vand.u32 %v1201, 4294901760
  %1203 = vmatpush1.xpose.msra.mxu0 %v1202
  %1204 = vmatprep.subr.mxu0 0.0
  %v1205 = vand.u32 %v278, 4294901760
  %v1206 = vsub.f32 %v278, %v1205
  %v1207 = vand.u32 %v1206, 4294901760
  %1208 = vmatpush1.xpose.msra.mxu0 %v1207
  %1209 = vmatprep.subr.mxu0 0.0
  %v1210 = vand.u32 %v275, 4294901760
  %v1211 = vsub.f32 %v275, %v1210
  %v1212 = vand.u32 %v1211, 4294901760
  %1213 = vmatpush1.xpose.msra.mxu0 %v1212
  %1214 = vmatprep.subr.mxu0 0.0
  %v1215 = vand.u32 %v272, 4294901760
  %v1216 = vsub.f32 %v272, %v1215
  %v1217 = vand.u32 %v1216, 4294901760
  %1218 = vmatpush1.xpose.msra.mxu0 %v1217
  %1219 = vmatprep.subr.mxu0 0.0
  %v1220 = vand.u32 %v269, 4294901760
  %v1221 = vsub.f32 %v269, %v1220
  %v1222 = vand.u32 %v1221, 4294901760
  %1223 = vmatpush1.xpose.msra.mxu0 %v1222
  %1224 = vmatprep.subr.mxu0 0.0
  %v1225 = vand.u32 %v266, 4294901760
  %v1226 = vsub.f32 %v266, %v1225
  %v1227 = vand.u32 %v1226, 4294901760
  %1228 = vmatpush1.xpose.msra.mxu0 %v1227
  %1229 = vmatprep.subr.mxu0 0.0
  %v1230 = vand.u32 %v263, 4294901760
  %v1231 = vsub.f32 %v263, %v1230
  %v1232 = vand.u32 %v1231, 4294901760
  %1233 = vmatpush1.xpose.msra.mxu0 %v1232
  %1234 = vmatprep.subr.mxu0 0.0
  %v1235 = vand.u32 %v260, 4294901760
  %v1236 = vsub.f32 %v260, %v1235
  %v1237 = vand.u32 %v1236, 4294901760
  %1238 = vmatpush1.xpose.msra.mxu0 %v1237
  %1239 = vmatprep.subr.mxu0 0.0
  %v1240 = vand.u32 %v257, 4294901760
  %v1241 = vsub.f32 %v257, %v1240
  %v1242 = vand.u32 %v1241, 4294901760
  %1243 = vmatpush1.xpose.msra.mxu0 %v1242
  %1244 = vmatprep.subr.mxu0 0.0
  %v1245 = vand.u32 %v254, 4294901760
  %v1246 = vsub.f32 %v254, %v1245
  %v1247 = vand.u32 %v1246, 4294901760
  %1248 = vmatpush1.xpose.msra.mxu0 %v1247
  %1249 = vmatprep.subr.mxu0 0.0
  %v1250 = vand.u32 %v251, 4294901760
  %v1251 = vsub.f32 %v251, %v1250
  %v1252 = vand.u32 %v1251, 4294901760
  %1253 = vmatpush1.xpose.msra.mxu0 %v1252
  %1254 = vmatprep.subr.mxu0 0.0
  %v1255 = vand.u32 %v248, 4294901760
  %v1256 = vsub.f32 %v248, %v1255
  %v1257 = vand.u32 %v1256, 4294901760
  %1258 = vmatpush1.xpose.msra.mxu0 %v1257
  %1259 = vmatprep.subr.mxu0 0.0
  %v1260 = vand.u32 %v245, 4294901760
  %v1261 = vsub.f32 %v245, %v1260
  %v1262 = vand.u32 %v1261, 4294901760
  %1263 = vmatpush1.xpose.msra.mxu0 %v1262
  %1264 = vmatprep.subr.mxu0 0.0
  %v1265 = vand.u32 %v242, 4294901760
  %v1266 = vsub.f32 %v242, %v1265
  %v1267 = vand.u32 %v1266, 4294901760
  %1268 = vmatpush1.xpose.msra.mxu0 %v1267
  %1269 = vmatprep.subr.mxu0 0.0
  %1270 = vmatpush2.xpose.msra.mxu0 0.0
  %1271 = vmatprep.subr.mxu0 0.0
  %1272 = vmatpush2.xpose.msra.mxu0 0.0
  %1273 = vmatprep.subr.mxu0 0.0
  %1274 = vmatpush2.xpose.msra.mxu0 0.0
  %1275 = vmatprep.subr.mxu0 0.0
  %1276 = vmatpush2.xpose.msra.mxu0 0.0
  %1277 = vmatprep.subr.mxu0 0.0
  %1278 = vmatpush2.xpose.msra.mxu0 0.0
  %1279 = vmatprep.subr.mxu0 0.0
  %1280 = vmatpush2.xpose.msra.mxu0 0.0
  %1281 = vmatprep.subr.mxu0 0.0
  %1282 = vmatpush2.xpose.msra.mxu0 0.0
  %1283 = vmatprep.subr.mxu0 0.0
  %1284 = vmatpush2.xpose.msra.mxu0 0.0
  %1285 = vmatprep.subr.mxu0 0.0
  %1286 = vmatpush2.xpose.msra.mxu0 0.0
  %1287 = vmatprep.subr.mxu0 0.0
  %1288 = vmatpush2.xpose.msra.mxu0 0.0
  %1289 = vmatprep.subr.mxu0 0.0
  %1290 = vmatpush2.xpose.msra.mxu0 0.0
  %1291 = vmatprep.subr.mxu0 0.0
  %1292 = vmatpush2.xpose.msra.mxu0 0.0
  %1293 = vmatprep.subr.mxu0 0.0
  %1294 = vmatpush2.xpose.msra.mxu0 0.0
  %1295 = vmatprep.subr.mxu0 0.0
  %1296 = vmatpush2.xpose.msra.mxu0 0.0
  %1297 = vmatprep.subr.mxu0 0.0
  %1298 = vmatpush2.xpose.msra.mxu0 0.0
  %1299 = vmatprep.subr.mxu0 0.0
  %1300 = vmatpush2.xpose.msra.mxu0 0.0
  %1301 = vmatprep.mubr.f32.mxu0 0.0
  %v1302 = vand.u32 %v194, 4294901760
  %1303 = vmatmul.mubr.f32.gmra.mxu0 %v1302
  %v1304 = vpop.f32.mrf.mxu0
  %v1305 = vadd.f32 %v1066, %v1304
  %v1306 = vpop.f32.mrf.mxu0
  %1307 = vmatprep.mubr.f32.mxu0 0.0
  %v1308 = vand.u32 %v197, 4294901760
  %1309 = vmatmul.mubr.f32.gmra.mxu0 %v1308
  %v1310 = vpop.f32.mrf.mxu0
  %v1311 = vadd.f32 %v1074, %v1310
  %v1312 = vpop.f32.mrf.mxu0
  %1313 = vmatprep.mubr.f32.mxu0 0.0
  %v1314 = vand.u32 %v200, 4294901760
  %1315 = vmatmul.mubr.f32.gmra.mxu0 %v1314
  %v1316 = vpop.f32.mrf.mxu0
  %v1317 = vadd.f32 %v1082, %v1316
  %v1318 = vpop.f32.mrf.mxu0
  %1319 = vmatprep.mubr.f32.mxu0 0.0
  %v1320 = vand.u32 %v203, 4294901760
  %1321 = vmatmul.mubr.f32.gmra.mxu0 %v1320
  %v1322 = vpop.f32.mrf.mxu0
  %v1323 = vadd.f32 %v1090, %v1322
  %v1324 = vpop.f32.mrf.mxu0
  %1325 = vmatprep.mubr.f32.mxu0 0.0
  %v1326 = vand.u32 %v206, 4294901760
  %1327 = vmatmul.mubr.f32.gmra.mxu0 %v1326
  %v1328 = vpop.f32.mrf.mxu0
  %v1329 = vadd.f32 %v1098, %v1328
  %v1330 = vpop.f32.mrf.mxu0
  %1331 = vmatprep.mubr.f32.mxu0 0.0
  %v1332 = vand.u32 %v209, 4294901760
  %1333 = vmatmul.mubr.f32.gmra.mxu0 %v1332
  %v1334 = vpop.f32.mrf.mxu0
  %v1335 = vadd.f32 %v1106, %v1334
  %v1336 = vpop.f32.mrf.mxu0
  %1337 = vmatprep.mubr.f32.mxu0 0.0
  %v1338 = vand.u32 %v212, 4294901760
  %1339 = vmatmul.mubr.f32.gmra.mxu0 %v1338
  %v1340 = vpop.f32.mrf.mxu0
  %v1341 = vadd.f32 %v1114, %v1340
  %v1342 = vpop.f32.mrf.mxu0
  %1343 = vmatprep.mubr.f32.mxu0 0.0
  %v1344 = vand.u32 %v215, 4294901760
  %1345 = vmatmul.mubr.f32.gmra.mxu0 %v1344
  %v1346 = vpop.f32.mrf.mxu0
  %v1347 = vadd.f32 %v1122, %v1346
  %v1348 = vpop.f32.mrf.mxu0
  %1349 = vmatprep.mubr.f32.mxu0 0.0
  %v1350 = vand.u32 %v218, 4294901760
  %1351 = vmatmul.mubr.f32.gmra.mxu0 %v1350
  %v1352 = vpop.f32.mrf.mxu0
  %v1353 = vadd.f32 %v1130, %v1352
  %v1354 = vpop.f32.mrf.mxu0
  %1355 = vmatprep.mubr.f32.mxu0 0.0
  %v1356 = vand.u32 %v221, 4294901760
  %1357 = vmatmul.mubr.f32.gmra.mxu0 %v1356
  %v1358 = vpop.f32.mrf.mxu0
  %v1359 = vadd.f32 %v1138, %v1358
  %v1360 = vpop.f32.mrf.mxu0
  %1361 = vmatprep.mubr.f32.mxu0 0.0
  %v1362 = vand.u32 %v224, 4294901760
  %1363 = vmatmul.mubr.f32.gmra.mxu0 %v1362
  %v1364 = vpop.f32.mrf.mxu0
  %v1365 = vadd.f32 %v1146, %v1364
  %v1366 = vpop.f32.mrf.mxu0
  %1367 = vmatprep.mubr.f32.mxu0 0.0
  %v1368 = vand.u32 %v227, 4294901760
  %1369 = vmatmul.mubr.f32.gmra.mxu0 %v1368
  %v1370 = vpop.f32.mrf.mxu0
  %v1371 = vadd.f32 %v1154, %v1370
  %v1372 = vpop.f32.mrf.mxu0
  %1373 = vmatprep.mubr.f32.mxu0 0.0
  %v1374 = vand.u32 %v230, 4294901760
  %1375 = vmatmul.mubr.f32.gmra.mxu0 %v1374
  %v1376 = vpop.f32.mrf.mxu0
  %v1377 = vadd.f32 %v1162, %v1376
  %v1378 = vpop.f32.mrf.mxu0
  %1379 = vmatprep.mubr.f32.mxu0 0.0
  %v1380 = vand.u32 %v233, 4294901760
  %1381 = vmatmul.mubr.f32.gmra.mxu0 %v1380
  %v1382 = vpop.f32.mrf.mxu0
  %v1383 = vadd.f32 %v1170, %v1382
  %v1384 = vpop.f32.mrf.mxu0
  %1385 = vmatprep.mubr.f32.mxu0 0.0
  %v1386 = vand.u32 %v236, 4294901760
  %1387 = vmatmul.mubr.f32.gmra.mxu0 %v1386
  %v1388 = vpop.f32.mrf.mxu0
  %v1389 = vadd.f32 %v1178, %v1388
  %v1390 = vpop.f32.mrf.mxu0
  %1391 = vmatprep.mubr.f32.mxu0 0.0
  %v1392 = vand.u32 %v239, 4294901760
  %1393 = vmatmul.mubr.f32.gmra.mxu0 %v1392
  %v1394 = vpop.f32.mrf.mxu0
  %v1395 = vadd.f32 %v1186, %v1394
  %v1396 = vpop.f32.mrf.mxu0
  %1397 = vdwg.mxu0
  %1398 = vmatprep.subr.mxu0 0.0
  %v1399 = vand.u32 %v287, 4294901760
  %1400 = vmatpush1.xpose.msra.mxu0 %v1399
  %1401 = vmatprep.subr.mxu0 0.0
  %v1402 = vand.u32 %v284, 4294901760
  %1403 = vmatpush1.xpose.msra.mxu0 %v1402
  %1404 = vmatprep.subr.mxu0 0.0
  %v1405 = vand.u32 %v281, 4294901760
  %1406 = vmatpush1.xpose.msra.mxu0 %v1405
  %1407 = vmatprep.subr.mxu0 0.0
  %v1408 = vand.u32 %v278, 4294901760
  %1409 = vmatpush1.xpose.msra.mxu0 %v1408
  %1410 = vmatprep.subr.mxu0 0.0
  %v1411 = vand.u32 %v275, 4294901760
  %1412 = vmatpush1.xpose.msra.mxu0 %v1411
  %1413 = vmatprep.subr.mxu0 0.0
  %v1414 = vand.u32 %v272, 4294901760
  %1415 = vmatpush1.xpose.msra.mxu0 %v1414
  %1416 = vmatprep.subr.mxu0 0.0
  %v1417 = vand.u32 %v269, 4294901760
  %1418 = vmatpush1.xpose.msra.mxu0 %v1417
  %1419 = vmatprep.subr.mxu0 0.0
  %v1420 = vand.u32 %v266, 4294901760
  %1421 = vmatpush1.xpose.msra.mxu0 %v1420
  %1422 = vmatprep.subr.mxu0 0.0
  %v1423 = vand.u32 %v263, 4294901760
  %1424 = vmatpush1.xpose.msra.mxu0 %v1423
  %1425 = vmatprep.subr.mxu0 0.0
  %v1426 = vand.u32 %v260, 4294901760
  %1427 = vmatpush1.xpose.msra.mxu0 %v1426
  %1428 = vmatprep.subr.mxu0 0.0
  %v1429 = vand.u32 %v257, 4294901760
  %1430 = vmatpush1.xpose.msra.mxu0 %v1429
  %1431 = vmatprep.subr.mxu0 0.0
  %v1432 = vand.u32 %v254, 4294901760
  %1433 = vmatpush1.xpose.msra.mxu0 %v1432
  %1434 = vmatprep.subr.mxu0 0.0
  %v1435 = vand.u32 %v251, 4294901760
  %1436 = vmatpush1.xpose.msra.mxu0 %v1435
  %1437 = vmatprep.subr.mxu0 0.0
  %v1438 = vand.u32 %v248, 4294901760
  %1439 = vmatpush1.xpose.msra.mxu0 %v1438
  %1440 = vmatprep.subr.mxu0 0.0
  %v1441 = vand.u32 %v245, 4294901760
  %1442 = vmatpush1.xpose.msra.mxu0 %v1441
  %1443 = vmatprep.subr.mxu0 0.0
  %v1444 = vand.u32 %v242, 4294901760
  %1445 = vmatpush1.xpose.msra.mxu0 %v1444
  %1446 = vmatprep.subr.mxu0 0.0
  %1447 = vmatpush2.xpose.msra.mxu0 0.0
  %1448 = vmatprep.subr.mxu0 0.0
  %1449 = vmatpush2.xpose.msra.mxu0 0.0
  %1450 = vmatprep.subr.mxu0 0.0
  %1451 = vmatpush2.xpose.msra.mxu0 0.0
  %1452 = vmatprep.subr.mxu0 0.0
  %1453 = vmatpush2.xpose.msra.mxu0 0.0
  %1454 = vmatprep.subr.mxu0 0.0
  %1455 = vmatpush2.xpose.msra.mxu0 0.0
  %1456 = vmatprep.subr.mxu0 0.0
  %1457 = vmatpush2.xpose.msra.mxu0 0.0
  %1458 = vmatprep.subr.mxu0 0.0
  %1459 = vmatpush2.xpose.msra.mxu0 0.0
  %1460 = vmatprep.subr.mxu0 0.0
  %1461 = vmatpush2.xpose.msra.mxu0 0.0
  %1462 = vmatprep.subr.mxu0 0.0
  %1463 = vmatpush2.xpose.msra.mxu0 0.0
  %1464 = vmatprep.subr.mxu0 0.0
  %1465 = vmatpush2.xpose.msra.mxu0 0.0
  %1466 = vmatprep.subr.mxu0 0.0
  %1467 = vmatpush2.xpose.msra.mxu0 0.0
  %1468 = vmatprep.subr.mxu0 0.0
  %1469 = vmatpush2.xpose.msra.mxu0 0.0
  %1470 = vmatprep.subr.mxu0 0.0
  %1471 = vmatpush2.xpose.msra.mxu0 0.0
  %1472 = vmatprep.subr.mxu0 0.0
  %1473 = vmatpush2.xpose.msra.mxu0 0.0
  %1474 = vmatprep.subr.mxu0 0.0
  %1475 = vmatpush2.xpose.msra.mxu0 0.0
  %1476 = vmatprep.subr.mxu0 0.0
  %1477 = vmatpush2.xpose.msra.mxu0 0.0
  %1478 = vmatprep.mubr.f32.mxu0 0.0
  %v1479 = vand.u32 %v194, 4294901760
  %1480 = vmatmul.mubr.f32.gmra.mxu0 %v1479
  %v1481 = vpop.f32.mrf.mxu0
  %v1482 = vadd.f32 %v1305, %v1481
  %v1483 = vpop.f32.mrf.mxu0
  %1484 = vmatprep.mubr.f32.mxu0 0.0
  %v1485 = vand.u32 %v197, 4294901760
  %1486 = vmatmul.mubr.f32.gmra.mxu0 %v1485
  %v1487 = vpop.f32.mrf.mxu0
  %v1488 = vadd.f32 %v1311, %v1487
  %v1489 = vpop.f32.mrf.mxu0
  %1490 = vmatprep.mubr.f32.mxu0 0.0
  %v1491 = vand.u32 %v200, 4294901760
  %1492 = vmatmul.mubr.f32.gmra.mxu0 %v1491
  %v1493 = vpop.f32.mrf.mxu0
  %v1494 = vadd.f32 %v1317, %v1493
  %v1495 = vpop.f32.mrf.mxu0
  %1496 = vmatprep.mubr.f32.mxu0 0.0
  %v1497 = vand.u32 %v203, 4294901760
  %1498 = vmatmul.mubr.f32.gmra.mxu0 %v1497
  %v1499 = vpop.f32.mrf.mxu0
  %v1500 = vadd.f32 %v1323, %v1499
  %v1501 = vpop.f32.mrf.mxu0
  %1502 = vmatprep.mubr.f32.mxu0 0.0
  %v1503 = vand.u32 %v206, 4294901760
  %1504 = vmatmul.mubr.f32.gmra.mxu0 %v1503
  %v1505 = vpop.f32.mrf.mxu0
  %v1506 = vadd.f32 %v1329, %v1505
  %v1507 = vpop.f32.mrf.mxu0
  %1508 = vmatprep.mubr.f32.mxu0 0.0
  %v1509 = vand.u32 %v209, 4294901760
  %1510 = vmatmul.mubr.f32.gmra.mxu0 %v1509
  %v1511 = vpop.f32.mrf.mxu0
  %v1512 = vadd.f32 %v1335, %v1511
  %v1513 = vpop.f32.mrf.mxu0
  %1514 = vmatprep.mubr.f32.mxu0 0.0
  %v1515 = vand.u32 %v212, 4294901760
  %1516 = vmatmul.mubr.f32.gmra.mxu0 %v1515
  %v1517 = vpop.f32.mrf.mxu0
  %v1518 = vadd.f32 %v1341, %v1517
  %v1519 = vpop.f32.mrf.mxu0
  %1520 = vmatprep.mubr.f32.mxu0 0.0
  %v1521 = vand.u32 %v215, 4294901760
  %1522 = vmatmul.mubr.f32.gmra.mxu0 %v1521
  %v1523 = vpop.f32.mrf.mxu0
  %v1524 = vadd.f32 %v1347, %v1523
  %v1525 = vpop.f32.mrf.mxu0
  %1526 = vmatprep.mubr.f32.mxu0 0.0
  %v1527 = vand.u32 %v218, 4294901760
  %1528 = vmatmul.mubr.f32.gmra.mxu0 %v1527
  %v1529 = vpop.f32.mrf.mxu0
  %v1530 = vadd.f32 %v1353, %v1529
  %v1531 = vpop.f32.mrf.mxu0
  %1532 = vmatprep.mubr.f32.mxu0 0.0
  %v1533 = vand.u32 %v221, 4294901760
  %1534 = vmatmul.mubr.f32.gmra.mxu0 %v1533
  %v1535 = vpop.f32.mrf.mxu0
  %v1536 = vadd.f32 %v1359, %v1535
  %v1537 = vpop.f32.mrf.mxu0
  %1538 = vmatprep.mubr.f32.mxu0 0.0
  %v1539 = vand.u32 %v224, 4294901760
  %1540 = vmatmul.mubr.f32.gmra.mxu0 %v1539
  %v1541 = vpop.f32.mrf.mxu0
  %v1542 = vadd.f32 %v1365, %v1541
  %v1543 = vpop.f32.mrf.mxu0
  %1544 = vmatprep.mubr.f32.mxu0 0.0
  %v1545 = vand.u32 %v227, 4294901760
  %1546 = vmatmul.mubr.f32.gmra.mxu0 %v1545
  %v1547 = vpop.f32.mrf.mxu0
  %v1548 = vadd.f32 %v1371, %v1547
  %v1549 = vpop.f32.mrf.mxu0
  %1550 = vmatprep.mubr.f32.mxu0 0.0
  %v1551 = vand.u32 %v230, 4294901760
  %1552 = vmatmul.mubr.f32.gmra.mxu0 %v1551
  %v1553 = vpop.f32.mrf.mxu0
  %v1554 = vadd.f32 %v1377, %v1553
  %v1555 = vpop.f32.mrf.mxu0
  %1556 = vmatprep.mubr.f32.mxu0 0.0
  %v1557 = vand.u32 %v233, 4294901760
  %1558 = vmatmul.mubr.f32.gmra.mxu0 %v1557
  %v1559 = vpop.f32.mrf.mxu0
  %v1560 = vadd.f32 %v1383, %v1559
  %v1561 = vpop.f32.mrf.mxu0
  %1562 = vmatprep.mubr.f32.mxu0 0.0
  %v1563 = vand.u32 %v236, 4294901760
  %1564 = vmatmul.mubr.f32.gmra.mxu0 %v1563
  %v1565 = vpop.f32.mrf.mxu0
  %v1566 = vadd.f32 %v1389, %v1565
  %v1567 = vpop.f32.mrf.mxu0
  %1568 = vmatprep.mubr.f32.mxu0 0.0
  %v1569 = vand.u32 %v239, 4294901760
  %1570 = vmatmul.mubr.f32.gmra.mxu0 %v1569
  %v1571 = vpop.f32.mrf.mxu0
  %v1572 = vadd.f32 %v1395, %v1571
  %v1573 = vpop.f32.mrf.mxu0
  %1574 = vdwg.mxu0
  %v1575 = vadd.f32 %v144, %v1482
  %v1576 = vadd.f32 %v145, %v1488
  %v1577 = vadd.f32 %v146, %v1494
  %v1578 = vadd.f32 %v147, %v1500
  %v1579 = vadd.f32 %v148, %v1506
  %v1580 = vadd.f32 %v149, %v1512
  %v1581 = vadd.f32 %v150, %v1518
  %v1582 = vadd.f32 %v151, %v1524
  %v1583 = vadd.f32 %v152, %v1530
  %v1584 = vadd.f32 %v153, %v1536
  %v1585 = vadd.f32 %v154, %v1542
  %v1586 = vadd.f32 %v155, %v1548
  %v1587 = vadd.f32 %v156, %v1554
  %v1588 = vadd.f32 %v157, %v1560
  %v1589 = vadd.f32 %v158, %v1566
  %v1590 = vadd.f32 %v159, %v1572
  %1591 = vst [vmem:[%s120] sm:$0xff] %v1575
  %1592 = vst [vmem:[%s120 + $0x8] sm:$0xff] %v1576
  %1593 = vst [vmem:[%s120 + $0x10] sm:$0xff] %v1577
  %1594 = vst [vmem:[%s120 + $0x18] sm:$0xff] %v1578
  %1595 = vst [vmem:[%s120 + $0x20] sm:$0xff] %v1579
  %1596 = vst [vmem:[%s120 + $0x28] sm:$0xff] %v1580
  %1597 = vst [vmem:[%s120 + $0x30] sm:$0xff] %v1581
  %1598 = vst [vmem:[%s120 + $0x38] sm:$0xff] %v1582
  %1599 = vst [vmem:[%s120 + $0x40] sm:$0xff] %v1583
  %1600 = vst [vmem:[%s120 + $0x48] sm:$0xff] %v1584
  %1601 = vst [vmem:[%s120 + $0x50] sm:$0xff] %v1585
  %1602 = vst [vmem:[%s120 + $0x58] sm:$0xff] %v1586
  %1603 = vst [vmem:[%s120 + $0x60] sm:$0xff] %v1587
  %1604 = vst [vmem:[%s120 + $0x68] sm:$0xff] %v1588
  %1605 = vst [vmem:[%s120 + $0x70] sm:$0xff] %v1589
  %1606 = vst [vmem:[%s120 + $0x78] sm:$0xff] %v1590
  // Predicated region
  $region22: #{_pairwise_dist_impl.1} parent=0 // pred_check
    %p1607 = pneg %p124
  $region23: #{_pairwise_dist_impl.1} parent=0 // pred_check_branch
    %1609 = sbr.rel (%p1607) target = $region25
  $region24: #{_pairwise_dist_impl.1} parent=0 // pred_region
    %v1610 = vld [vmem:[%s87] sm:$0xff]
    %v1611 = vld [vmem:[%s87 + $0x8] sm:$0xff]
    %v1612 = vld [vmem:[%s87 + $0x10] sm:$0xff]
    %v1613 = vld [vmem:[%s87 + $0x18] sm:$0xff]
    %v1614 = vld [vmem:[%s87 + $0x20] sm:$0xff]
    %v1615 = vld [vmem:[%s87 + $0x28] sm:$0xff]
    %v1616 = vld [vmem:[%s87 + $0x30] sm:$0xff]
    %v1617 = vld [vmem:[%s87 + $0x38] sm:$0xff]
    %v1618 = vld [vmem:[%s87 + $0x40] sm:$0xff]
    %v1619 = vld [vmem:[%s87 + $0x48] sm:$0xff]
    %v1620 = vld [vmem:[%s87 + $0x50] sm:$0xff]
    %v1621 = vld [vmem:[%s87 + $0x58] sm:$0xff]
    %v1622 = vld [vmem:[%s87 + $0x60] sm:$0xff]
    %v1623 = vld [vmem:[%s87 + $0x68] sm:$0xff]
    %v1624 = vld [vmem:[%s87 + $0x70] sm:$0xff]
    %v1625 = vld [vmem:[%s87 + $0x78] sm:$0xff]
    %v1626 = vld [vmem:[%s93] sm:$0x1]
    %1628 = vset.pattern.permute.xlu0 0
    %1629 = vperm.xlu0 %1628, %v1610
    %v1630 = vpop.permute.xlu0 %1629
    %1633 = vset.pattern.permute.xlu0 0
    %1634 = vperm.xlu0 %1633, %v1611
    %v1635 = vpop.permute.xlu0 %1634
    %1638 = vset.pattern.permute.xlu0 0
    %1639 = vperm.xlu0 %1638, %v1612
    %v1640 = vpop.permute.xlu0 %1639
    %1643 = vset.pattern.permute.xlu0 0
    %1644 = vperm.xlu0 %1643, %v1613
    %v1645 = vpop.permute.xlu0 %1644
    %1648 = vset.pattern.permute.xlu0 0
    %1649 = vperm.xlu0 %1648, %v1614
    %v1650 = vpop.permute.xlu0 %1649
    %1653 = vset.pattern.permute.xlu0 0
    %1654 = vperm.xlu0 %1653, %v1615
    %v1655 = vpop.permute.xlu0 %1654
    %1658 = vset.pattern.permute.xlu0 0
    %1659 = vperm.xlu0 %1658, %v1616
    %v1660 = vpop.permute.xlu0 %1659
    %1663 = vset.pattern.permute.xlu0 0
    %1664 = vperm.xlu0 %1663, %v1617
    %v1665 = vpop.permute.xlu0 %1664
    %1668 = vset.pattern.permute.xlu0 0
    %1669 = vperm.xlu0 %1668, %v1618
    %v1670 = vpop.permute.xlu0 %1669
    %1673 = vset.pattern.permute.xlu0 0
    %1674 = vperm.xlu0 %1673, %v1619
    %v1675 = vpop.permute.xlu0 %1674
    %1678 = vset.pattern.permute.xlu0 0
    %1679 = vperm.xlu0 %1678, %v1620
    %v1680 = vpop.permute.xlu0 %1679
    %1683 = vset.pattern.permute.xlu0 0
    %1684 = vperm.xlu0 %1683, %v1621
    %v1685 = vpop.permute.xlu0 %1684
    %1688 = vset.pattern.permute.xlu0 0
    %1689 = vperm.xlu0 %1688, %v1622
    %v1690 = vpop.permute.xlu0 %1689
    %1693 = vset.pattern.permute.xlu0 0
    %1694 = vperm.xlu0 %1693, %v1623
    %v1695 = vpop.permute.xlu0 %1694
    %1698 = vset.pattern.permute.xlu0 0
    %1699 = vperm.xlu0 %1698, %v1624
    %v1700 = vpop.permute.xlu0 %1699
    %1703 = vset.pattern.permute.xlu0 0
    %1704 = vperm.xlu0 %1703, %v1625
    %v1705 = vpop.permute.xlu0 %1704
    %v1708 = vlaneseq
    %v1709 = vshrl.u32 %v1708, 7
    %v1710 = vsub.s32 0, %v1709
    %v1711 = vrot.slane %v1626, %v1710
    %v1713 = vadd.f32 %v1630, %v1711
    %v1714 = vadd.f32 %v1635, %v1711
    %v1715 = vadd.f32 %v1640, %v1711
    %v1716 = vadd.f32 %v1645, %v1711
    %v1717 = vadd.f32 %v1650, %v1711
    %v1718 = vadd.f32 %v1655, %v1711
    %v1719 = vadd.f32 %v1660, %v1711
    %v1720 = vadd.f32 %v1665, %v1711
    %v1721 = vadd.f32 %v1670, %v1711
    %v1722 = vadd.f32 %v1675, %v1711
    %v1723 = vadd.f32 %v1680, %v1711
    %v1724 = vadd.f32 %v1685, %v1711
    %v1725 = vadd.f32 %v1690, %v1711
    %v1726 = vadd.f32 %v1695, %v1711
    %v1727 = vadd.f32 %v1700, %v1711
    %v1728 = vadd.f32 %v1705, %v1711
    %v1729 = vld [vmem:[%s120] sm:$0xff]
    %v1730 = vld [vmem:[%s120 + $0x8] sm:$0xff]
    %v1731 = vld [vmem:[%s120 + $0x10] sm:$0xff]
    %v1732 = vld [vmem:[%s120 + $0x18] sm:$0xff]
    %v1733 = vld [vmem:[%s120 + $0x20] sm:$0xff]
    %v1734 = vld [vmem:[%s120 + $0x28] sm:$0xff]
    %v1735 = vld [vmem:[%s120 + $0x30] sm:$0xff]
    %v1736 = vld [vmem:[%s120 + $0x38] sm:$0xff]
    %v1737 = vld [vmem:[%s120 + $0x40] sm:$0xff]
    %v1738 = vld [vmem:[%s120 + $0x48] sm:$0xff]
    %v1739 = vld [vmem:[%s120 + $0x50] sm:$0xff]
    %v1740 = vld [vmem:[%s120 + $0x58] sm:$0xff]
    %v1741 = vld [vmem:[%s120 + $0x60] sm:$0xff]
    %v1742 = vld [vmem:[%s120 + $0x68] sm:$0xff]
    %v1743 = vld [vmem:[%s120 + $0x70] sm:$0xff]
    %v1744 = vld [vmem:[%s120 + $0x78] sm:$0xff]
    %v1745 = vmul.f32 %v1729, 2.0
    %v1746 = vmul.f32 %v1730, 2.0
    %v1747 = vmul.f32 %v1731, 2.0
    %v1748 = vmul.f32 %v1732, 2.0
    %v1749 = vmul.f32 %v1733, 2.0
    %v1750 = vmul.f32 %v1734, 2.0
    %v1751 = vmul.f32 %v1735, 2.0
    %v1752 = vmul.f32 %v1736, 2.0
    %v1753 = vmul.f32 %v1737, 2.0
    %v1754 = vmul.f32 %v1738, 2.0
    %v1755 = vmul.f32 %v1739, 2.0
    %v1756 = vmul.f32 %v1740, 2.0
    %v1757 = vmul.f32 %v1741, 2.0
    %v1758 = vmul.f32 %v1742, 2.0
    %v1759 = vmul.f32 %v1743, 2.0
    %v1760 = vmul.f32 %v1744, 2.0
    %v1761 = vsub.f32 %v1713, %v1745
    %v1762 = vsub.f32 %v1714, %v1746
    %v1763 = vsub.f32 %v1715, %v1747
    %v1764 = vsub.f32 %v1716, %v1748
    %v1765 = vsub.f32 %v1717, %v1749
    %v1766 = vsub.f32 %v1718, %v1750
    %v1767 = vsub.f32 %v1719, %v1751
    %v1768 = vsub.f32 %v1720, %v1752
    %v1769 = vsub.f32 %v1721, %v1753
    %v1770 = vsub.f32 %v1722, %v1754
    %v1771 = vsub.f32 %v1723, %v1755
    %v1772 = vsub.f32 %v1724, %v1756
    %v1773 = vsub.f32 %v1725, %v1757
    %v1774 = vsub.f32 %v1726, %v1758
    %v1775 = vsub.f32 %v1727, %v1759
    %v1776 = vsub.f32 %v1728, %v1760
    %v1777 = vmax.f32 %v1761, 1e-12
    %v1778 = vmax.f32 %v1762, 1e-12
    %v1779 = vmax.f32 %v1763, 1e-12
    %v1780 = vmax.f32 %v1764, 1e-12
    %v1781 = vmax.f32 %v1765, 1e-12
    %v1782 = vmax.f32 %v1766, 1e-12
    %v1783 = vmax.f32 %v1767, 1e-12
    %v1784 = vmax.f32 %v1768, 1e-12
    %v1785 = vmax.f32 %v1769, 1e-12
    %v1786 = vmax.f32 %v1770, 1e-12
    %v1787 = vmax.f32 %v1771, 1e-12
    %v1788 = vmax.f32 %v1772, 1e-12
    %v1789 = vmax.f32 %v1773, 1e-12
    %v1790 = vmax.f32 %v1774, 1e-12
    %v1791 = vmax.f32 %v1775, 1e-12
    %v1792 = vmax.f32 %v1776, 1e-12
    %v1793 = vrsqrt.pop %v1777
    %v1794 = vmul.f32 %v1777, %v1793
    %vm1795 = vcmp.eq.f32.partialorder %v1777, inf
    %v1796 = vsel %vm1795, %v1777, %v1794
    %vm1797 = vcmp.eq.f32.partialorder %v1777, 0.0
    %v1798 = vand.u32 %v1777, 2147483648
    %v1799 = vsel %vm1797, %v1798, %v1796
    %v1800 = vrsqrt.pop %v1778
    %v1801 = vmul.f32 %v1778, %v1800
    %vm1802 = vcmp.eq.f32.partialorder %v1778, inf
    %v1803 = vsel %vm1802, %v1778, %v1801
    %vm1804 = vcmp.eq.f32.partialorder %v1778, 0.0
    %v1805 = vand.u32 %v1778, 2147483648
    %v1806 = vsel %vm1804, %v1805, %v1803
    %v1807 = vrsqrt.pop %v1779
    %v1808 = vmul.f32 %v1779, %v1807
    %vm1809 = vcmp.eq.f32.partialorder %v1779, inf
    %v1810 = vsel %vm1809, %v1779, %v1808
    %vm1811 = vcmp.eq.f32.partialorder %v1779, 0.0
    %v1812 = vand.u32 %v1779, 2147483648
    %v1813 = vsel %vm1811, %v1812, %v1810
    %v1814 = vrsqrt.pop %v1780
    %v1815 = vmul.f32 %v1780, %v1814
    %vm1816 = vcmp.eq.f32.partialorder %v1780, inf
    %v1817 = vsel %vm1816, %v1780, %v1815
    %vm1818 = vcmp.eq.f32.partialorder %v1780, 0.0
    %v1819 = vand.u32 %v1780, 2147483648
    %v1820 = vsel %vm1818, %v1819, %v1817
    %v1821 = vrsqrt.pop %v1781
    %v1822 = vmul.f32 %v1781, %v1821
    %vm1823 = vcmp.eq.f32.partialorder %v1781, inf
    %v1824 = vsel %vm1823, %v1781, %v1822
    %vm1825 = vcmp.eq.f32.partialorder %v1781, 0.0
    %v1826 = vand.u32 %v1781, 2147483648
    %v1827 = vsel %vm1825, %v1826, %v1824
    %v1828 = vrsqrt.pop %v1782
    %v1829 = vmul.f32 %v1782, %v1828
    %vm1830 = vcmp.eq.f32.partialorder %v1782, inf
    %v1831 = vsel %vm1830, %v1782, %v1829
    %vm1832 = vcmp.eq.f32.partialorder %v1782, 0.0
    %v1833 = vand.u32 %v1782, 2147483648
    %v1834 = vsel %vm1832, %v1833, %v1831
    %v1835 = vrsqrt.pop %v1783
    %v1836 = vmul.f32 %v1783, %v1835
    %vm1837 = vcmp.eq.f32.partialorder %v1783, inf
    %v1838 = vsel %vm1837, %v1783, %v1836
    %vm1839 = vcmp.eq.f32.partialorder %v1783, 0.0
    %v1840 = vand.u32 %v1783, 2147483648
    %v1841 = vsel %vm1839, %v1840, %v1838
    %v1842 = vrsqrt.pop %v1784
    %v1843 = vmul.f32 %v1784, %v1842
    %vm1844 = vcmp.eq.f32.partialorder %v1784, inf
    %v1845 = vsel %vm1844, %v1784, %v1843
    %vm1846 = vcmp.eq.f32.partialorder %v1784, 0.0
    %v1847 = vand.u32 %v1784, 2147483648
    %v1848 = vsel %vm1846, %v1847, %v1845
    %v1849 = vrsqrt.pop %v1785
    %v1850 = vmul.f32 %v1785, %v1849
    %vm1851 = vcmp.eq.f32.partialorder %v1785, inf
    %v1852 = vsel %vm1851, %v1785, %v1850
    %vm1853 = vcmp.eq.f32.partialorder %v1785, 0.0
    %v1854 = vand.u32 %v1785, 2147483648
    %v1855 = vsel %vm1853, %v1854, %v1852
    %v1856 = vrsqrt.pop %v1786
    %v1857 = vmul.f32 %v1786, %v1856
    %vm1858 = vcmp.eq.f32.partialorder %v1786, inf
    %v1859 = vsel %vm1858, %v1786, %v1857
    %vm1860 = vcmp.eq.f32.partialorder %v1786, 0.0
    %v1861 = vand.u32 %v1786, 2147483648
    %v1862 = vsel %vm1860, %v1861, %v1859
    %v1863 = vrsqrt.pop %v1787
    %v1864 = vmul.f32 %v1787, %v1863
    %vm1865 = vcmp.eq.f32.partialorder %v1787, inf
    %v1866 = vsel %vm1865, %v1787, %v1864
    %vm1867 = vcmp.eq.f32.partialorder %v1787, 0.0
    %v1868 = vand.u32 %v1787, 2147483648
    %v1869 = vsel %vm1867, %v1868, %v1866
    %v1870 = vrsqrt.pop %v1788
    %v1871 = vmul.f32 %v1788, %v1870
    %vm1872 = vcmp.eq.f32.partialorder %v1788, inf
    %v1873 = vsel %vm1872, %v1788, %v1871
    %vm1874 = vcmp.eq.f32.partialorder %v1788, 0.0
    %v1875 = vand.u32 %v1788, 2147483648
    %v1876 = vsel %vm1874, %v1875, %v1873
    %v1877 = vrsqrt.pop %v1789
    %v1878 = vmul.f32 %v1789, %v1877
    %vm1879 = vcmp.eq.f32.partialorder %v1789, inf
    %v1880 = vsel %vm1879, %v1789, %v1878
    %vm1881 = vcmp.eq.f32.partialorder %v1789, 0.0
    %v1882 = vand.u32 %v1789, 2147483648
    %v1883 = vsel %vm1881, %v1882, %v1880
    %v1884 = vrsqrt.pop %v1790
    %v1885 = vmul.f32 %v1790, %v1884
    %vm1886 = vcmp.eq.f32.partialorder %v1790, inf
    %v1887 = vsel %vm1886, %v1790, %v1885
    %vm1888 = vcmp.eq.f32.partialorder %v1790, 0.0
    %v1889 = vand.u32 %v1790, 2147483648
    %v1890 = vsel %vm1888, %v1889, %v1887
    %v1891 = vrsqrt.pop %v1791
    %v1892 = vmul.f32 %v1791, %v1891
    %vm1893 = vcmp.eq.f32.partialorder %v1791, inf
    %v1894 = vsel %vm1893, %v1791, %v1892
    %vm1895 = vcmp.eq.f32.partialorder %v1791, 0.0
    %v1896 = vand.u32 %v1791, 2147483648
    %v1897 = vsel %vm1895, %v1896, %v1894
    %v1898 = vrsqrt.pop %v1792
    %v1899 = vmul.f32 %v1792, %v1898
    %vm1900 = vcmp.eq.f32.partialorder %v1792, inf
    %v1901 = vsel %vm1900, %v1792, %v1899
    %vm1902 = vcmp.eq.f32.partialorder %v1792, 0.0
    %v1903 = vand.u32 %v1792, 2147483648
    %v1904 = vsel %vm1902, %v1903, %v1901
    %1905 = vst [vmem:[%s120] sm:$0xff] %v1799
    %1906 = vst [vmem:[%s120 + $0x8] sm:$0xff] %v1806
    %1907 = vst [vmem:[%s120 + $0x10] sm:$0xff] %v1813
    %1908 = vst [vmem:[%s120 + $0x18] sm:$0xff] %v1820
    %1909 = vst [vmem:[%s120 + $0x20] sm:$0xff] %v1827
    %1910 = vst [vmem:[%s120 + $0x28] sm:$0xff] %v1834
    %1911 = vst [vmem:[%s120 + $0x30] sm:$0xff] %v1841
    %1912 = vst [vmem:[%s120 + $0x38] sm:$0xff] %v1848
    %1913 = vst [vmem:[%s120 + $0x40] sm:$0xff] %v1855
    %1914 = vst [vmem:[%s120 + $0x48] sm:$0xff] %v1862
    %1915 = vst [vmem:[%s120 + $0x50] sm:$0xff] %v1869
    %1916 = vst [vmem:[%s120 + $0x58] sm:$0xff] %v1876
    %1917 = vst [vmem:[%s120 + $0x60] sm:$0xff] %v1883
    %1918 = vst [vmem:[%s120 + $0x68] sm:$0xff] %v1890
    %1919 = vst [vmem:[%s120 + $0x70] sm:$0xff] %v1897
    %1920 = vst [vmem:[%s120 + $0x78] sm:$0xff] %v1904
  $region25: #{_pairwise_dist_impl.1} parent=0 // pred_fallthru
    _
  %s1921 = sld [smem:[#allocation3]]
  %s1922 = sld [smem:[#allocation4]]
  %s1923 = smul.u32 16, %s1921
  %p1924 = scmp.lt.s32.totalorder %s1923, 15
  %s1925 = scalar_select %p1924, %s1923, 15
  %p1926 = scmp.lt.s32.totalorder %s1922, 0
  %s1927 = scalar_select %p1926, %s1922, 0
  %s1928 = sadd.s32 %s1927, %s1925
  %s1929 = smul.addr %s1928, 8
  %s1930 = scalar_lea.vmem %s6, %s1929
  // Predicated region
  $region26: #{_pairwise_dist_impl.1} parent=0 // pred_check
    _
  $region27: #{_pairwise_dist_impl.1} parent=0 // pred_check_branch
    %1932 = sbr.rel (0) target = $region29
  $region28: #{_pairwise_dist_impl.1} parent=0 // pred_region
    %s1933 = sld [smem:[#allocation3]]
    %s1934 = sld [smem:[#allocation4]]
    %s1935 = smul.u32 16, %s1933
  $region29: #{_pairwise_dist_impl.1} parent=0 // pred_fallthru
    _
  // Predicated region
  $region30: #{_pairwise_dist_impl.1} parent=0 // pred_check
    _
  $region31: #{_pairwise_dist_impl.1} parent=0 // pred_check_branch
    %1937 = sbr.rel (0) target = $region33
  $region32: #{_pairwise_dist_impl.1} parent=0 // pred_region
    %s1938 = sld [smem:[#allocation3]]
    %s1939 = sld [smem:[#allocation4]]
    %s1940 = smul.u32 16, %s1938
    %p1941 = scmp.lt.s32.totalorder %s1940, 15
    %s1942 = scalar_select %p1941, %s1940, 15
    %p1943 = scmp.lt.s32.totalorder %s1939, 0
    %s1944 = scalar_select %p1943, %s1939, 0
    %s1945 = sadd.s32 %s1944, %s1942
    %s1946 = smul.addr %s1945, 8
    %s1947 = scalar_lea.vmem %s6, %s1946
  $region33: #{_pairwise_dist_impl.1} parent=0 // pred_fallthru
    _

</llo_original>
